<compile_context>
chip_gen: v7x
topology: tpu7x:2x2x1
jax: 0.10.0
libtpu: 0.0.40
codegen_flags: <defaults>
</compile_context>

<pallas_src>
import functools

import jax
import jax.numpy as jnp
from jax.experimental import pallas as pl
from jax.experimental.pallas import tpu as pltpu

LANE = 128


def _round_up(n, m):
    return ((n + m - 1) // m) * m


def _cdiv(a, b):
    return (a + b - 1) // b


# ----------------------------------------------------------------------------
# Init-time helper: exact dense lowering of a Conv2d (NCHW flatten ordering).
# ----------------------------------------------------------------------------
def conv2d_to_dense(w, stride, padding, in_hw):
    """Return M of shape (IC*IH*IW, OC*OH*OW) such that, for an NCHW-flattened
    input vector v:  flatten_NCHW(conv2d(v)) == v @ M   (bias excluded)."""
    oc, ic, kh, kw = w.shape
    ih_dim, iw_dim = in_hw
    oh_dim = (ih_dim + 2 * padding - kh) // stride + 1
    ow_dim = (iw_dim + 2 * padding - kw) // stride + 1

    co, ci, ki, kj, oh, ow = jnp.meshgrid(
        jnp.arange(oc), jnp.arange(ic), jnp.arange(kh), jnp.arange(kw),
        jnp.arange(oh_dim), jnp.arange(ow_dim), indexing="ij")
    co, ci, ki, kj, oh, ow = (a.reshape(-1) for a in (co, ci, ki, kj, oh, ow))

    ih = oh * stride + ki - padding
    iw = ow * stride + kj - padding
    valid = (ih >= 0) & (ih < ih_dim) & (iw >= 0) & (iw < iw_dim)

    rows = (ci * (ih_dim * iw_dim)
            + jnp.clip(ih, 0, ih_dim - 1) * iw_dim
            + jnp.clip(iw, 0, iw_dim - 1))
    cols = co * (oh_dim * ow_dim) + oh * ow_dim + ow
    vals = jnp.where(valid, w[co, ci, ki, kj], 0.0)

    mat = jnp.zeros((ic * ih_dim * iw_dim, oc * oh_dim * ow_dim),
                    jnp.float32).at[rows, cols].add(vals)
    return mat, (oh_dim, ow_dim)


# ----------------------------------------------------------------------------
# Fused Pallas kernel: the whole forward pass for one tile of TM images.
#   refs = (x_ref, w0, b0, w1, b1, ..., w_{L-1}, b_{L-1}, o_ref)
# x is bf16, weights bf16, biases f32 (1, Np); accumulation in f32.
# ----------------------------------------------------------------------------
def _fused_forward_kernel(*refs, n_layers):
    x_ref = refs[0]
    o_ref = refs[-1]
    wb = refs[1:-1]

    h = x_ref[...]                                       # (TM, D0p) bf16
    for l in range(n_layers):
        w_ref = wb[2 * l]
        b_ref = wb[2 * l + 1]
        lhs = h if h.dtype == jnp.bfloat16 else h.astype(jnp.bfloat16)
        acc = jnp.dot(lhs, w_ref[...],
                      preferred_element_type=jnp.float32)
        acc = acc + b_ref[...]                           # f32 bias add
        if l < n_layers - 1:
            acc = jnp.maximum(acc, 0.0)                  # ReLU (all but last)
        h = acc
    o_ref[...] = h.astype(o_ref.dtype)


# ----------------------------------------------------------------------------
# Batch tile selection.
#   * >= 2 grid steps (and an even count, for v7x's two TensorCores) whenever
#     the batch is big enough that each tile keeps >= 64 rows.
#   * tm derived from ceil(batch / n_steps) -> minimal padding waste.
#   * tm rounded to 16 (bf16 sublane packing), capped at 512.
# ----------------------------------------------------------------------------
def _choose_tile(batch):
    TM_MAX = 512
    TM_MIN_SPLIT = 64
    if batch >= 2 * TM_MIN_SPLIT:
        n_steps = max(2, _cdiv(batch, TM_MAX))
        n_steps += n_steps % 2            # even -> both v7x cores busy
    else:
        n_steps = 1
    tm = _round_up(_cdiv(batch, n_steps), 16)
    return tm, tm * n_steps, n_steps


# ----------------------------------------------------------------------------
# Network2D
# ----------------------------------------------------------------------------
class Network2DPallas:
    def __init__(self, x_dim, y_dim, fc_dim=32, *, conv_layers, key):
        self.x_dim = tuple(x_dim)
        self.y_dim = tuple(y_dim)
        c, h, w = x_dim

        # ---- raw f32 parameters (PyTorch layouts, kept for the reference) --
        self.conv_ref_params = []          # (weight OIHW, bias, stride, pad)
        dense_layers = []                  # (W f32 (K, N), b f32 (N,))
        prev_c, ph, pw = c, h, w
        for layer in conv_layers:
            oc, ks = layer["channel_num"], layer["kernel_size"]
            st, pd = layer["stride"], layer["padding"]
            key, kw_, kb_ = jax.random.split(key, 3)
            wgt = 0.05 * jax.random.normal(kw_, (oc, prev_c, ks, ks), jnp.float32)
            bia = 0.05 * jax.random.normal(kb_, (oc,), jnp.float32)
            self.conv_ref_params.append((wgt, bia, st, pd))
            mat, (oh, ow) = conv2d_to_dense(wgt, st, pd, (ph, pw))
            dense_layers.append((mat, jnp.repeat(bia, oh * ow)))
            prev_c, ph, pw = oc, oh, ow

        flat_dim = prev_c * ph * pw        # NCHW flatten, matches PyTorch
        key, k1, k2, k3, k4 = jax.random.split(key, 5)
        self.fc1_w = 0.05 * jax.random.normal(k1, (flat_dim, fc_dim), jnp.float32)
        self.fc1_b = 0.05 * jax.random.normal(k2, (fc_dim,), jnp.float32)
        self.fc2_w = 0.05 * jax.random.normal(k3, (fc_dim, y_dim[0]), jnp.float32)
        self.fc2_b = 0.05 * jax.random.normal(k4, (y_dim[0],), jnp.float32)
        dense_layers.append((self.fc1_w, self.fc1_b))
        dense_layers.append((self.fc2_w, self.fc2_b))

        # ---- pad to lane-dense shapes: bf16 weights, f32 (1, Np) biases ----
        self.in_dim = c * h * w
        self.in_dim_p = _round_up(self.in_dim, LANE)
        self.params = []
        for mat, bia in dense_layers:
            kin, kout = mat.shape
            kin_p, kout_p = _round_up(kin, LANE), _round_up(kout, LANE)
            w_pad = jnp.zeros((kin_p, kout_p), jnp.bfloat16)
            w_pad = w_pad.at[:kin, :kout].set(mat.astype(jnp.bfloat16))
            b_pad = jnp.zeros((1, kout_p), jnp.float32).at[0, :kout].set(bia)
            self.params.append((w_pad, b_pad))
        self.n_layers = len(self.params)
        self.out_dim = y_dim[0]
        self.out_dim_p = self.params[-1][0].shape[1]

    def __call__(self, s_t):
        # apply_tensor_constraints: accept 3D (single image) or 4D (batch) NCHW.
        if s_t.ndim == 3:
            s_t = s_t[None, ...]
        assert s_t.ndim == 4, "input must be 3D (single image) or 4D (batch)"
        assert tuple(s_t.shape[1:]) == self.x_dim, (s_t.shape, self.x_dim)

        batch = s_t.shape[0]
        # NCHW flatten; ship as bf16 (only O(batch) HBM stream -> halved).
        flat = s_t.reshape(batch, self.in_dim).astype(jnp.bfloat16)
        if self.in_dim_p > self.in_dim:
            flat = jnp.pad(flat, ((0, 0), (0, self.in_dim_p - self.in_dim)))

        tm, batch_pad, n_steps = _choose_tile(batch)
        if batch_pad > batch:
            flat = jnp.pad(flat, ((0, batch_pad - batch), (0, 0)))

        kernel = functools.partial(_fused_forward_kernel, n_layers=self.n_layers)

        in_specs = [pl.BlockSpec((tm, self.in_dim_p), lambda i: (i, 0))]
        args = [flat]
        for w_pad, b_pad in self.params:
            # Constant index_map -> weights/biases stay resident in VMEM.
            in_specs.append(pl.BlockSpec(w_pad.shape, lambda i: (0, 0)))
            in_specs.append(pl.BlockSpec(b_pad.shape, lambda i: (0, 0)))
            args.append(w_pad)
            args.append(b_pad)

        out = pl.pallas_call(
            kernel,
            out_shape=jax.ShapeDtypeStruct((batch_pad, self.out_dim_p), jnp.float32),
            grid=(n_steps,),
            in_specs=in_specs,
            out_specs=pl.BlockSpec((tm, self.out_dim_p), lambda i: (i, 0)),
            compiler_params=pltpu.CompilerParams(
                dimension_semantics=("parallel",),      # megacore on v7x
                vmem_limit_bytes=32 * 1024 * 1024,      # safe on v5e/v6e/v7x
            ),
        )(*args)

        return out[:batch, :self.out_dim]


# ----------------------------------------------------------------------------
# Pure-JAX reference (uses XLA conv only for verification, never in the kernel)
# ----------------------------------------------------------------------------
def reference_forward(net, s_t):
    if s_t.ndim == 3:
        s_t = s_t[None, ...]
    h = s_t.astype(jnp.float32)
    for wgt, bia, st, pd in net.conv_ref_params:
        h = jax.lax.conv_general_dilated(
            h, wgt, window_strides=(st, st), padding=[(pd, pd), (pd, pd)],
            dimension_numbers=("NCHW", "OIHW", "NCHW"))
        h = jnp.maximum(h + bia[None, :, None, None], 0.0)
    h = h.reshape(h.shape[0], -1)                     # PyTorch NCHW flatten
    h = jnp.maximum(h @ net.fc1_w + net.fc1_b, 0.0)
    return h @ net.fc2_w + net.fc2_b


if __name__ == "__main__":
    key = jax.random.PRNGKey(0)
    key, x_key, x_key2, p_key = jax.random.split(key, 4)

    x_dim = (4, 16, 16)     # (C, H, W)
    y_dim = (10,)
    conv_layers = [
        {"channel_num": 8, "kernel_size": 3, "stride": 2, "padding": 1},
        {"channel_num": 16, "kernel_size": 3, "stride": 2, "padding": 1},
    ]

    net = Network2DPallas(x_dim, y_dim, fc_dim=32, conv_layers=conv_layers, key=p_key)

    # Small batch (grid=(1,)) — the canonical spec-sized check.
    x = jax.random.normal(x_key, (2,) + x_dim, dtype=jnp.float32)   # NCHW batch
    out = jax.block_until_ready(net(x))
    assert out.shape == (2, y_dim[0]), out.shape
    assert bool(jnp.all(jnp.isfinite(out)))
    ref = jax.block_until_ready(reference_forward(net, x))
    assert bool(jnp.allclose(out, ref, atol=3e-2, rtol=3e-2)), (
        float(jnp.max(jnp.abs(out - ref))))

    # Awkward batch (160 -> 2 grid steps, tm=80): exercises the new tiling
    # policy (even grid for v7x, minimal padding) and the pipelined path.
    x2 = jax.random.normal(x_key2, (160,) + x_dim, dtype=jnp.float32)
    out2 = jax.block_until_ready(net(x2))
    assert out2.shape == (160, y_dim[0]), out2.shape
    ref2 = jax.block_until_ready(reference_forward(net, x2))
    assert bool(jnp.allclose(out2, ref2, atol=3e-2, rtol=3e-2)), (
        float(jnp.max(jnp.abs(out2 - ref2))))

    print("KERNEL_OK")
</pallas_src>

<mosaic_0001>
module attributes {stable_mosaic.version = 11 : i64} {
  func.func @_fused_forward_kernel(%arg0: i32, %arg1: memref<16x1024xbf16, #tpu.memory_space<vmem>>, %arg2: memref<1024x512xbf16, #tpu.memory_space<vmem>>, %arg3: memref<1x512xf32, #tpu.memory_space<vmem>>, %arg4: memref<512x256xbf16, #tpu.memory_space<vmem>>, %arg5: memref<1x256xf32, #tpu.memory_space<vmem>>, %arg6: memref<256x128xbf16, #tpu.memory_space<vmem>>, %arg7: memref<1x128xf32, #tpu.memory_space<vmem>>, %arg8: memref<128x128xbf16, #tpu.memory_space<vmem>>, %arg9: memref<1x128xf32, #tpu.memory_space<vmem>>, %arg10: memref<16x128xf32, #tpu.memory_space<vmem>>) attributes {dimension_semantics = [#tpu.dimension_semantics<parallel>], iteration_bounds = array<i64: 1>, scalar_prefetch = 0 : i64, scratch_operands = 0 : i64, tpu.core_type = #tpu.core_type<tc>, window_params = [{transform_indices = @transform_0, window_bounds = array<i64: 16, 1024>}, {pipeline_mode = #tpu.pipeline_mode<synchronous>, transform_indices = @transform_1, window_bounds = array<i64: 1024, 512>}, {pipeline_mode = #tpu.pipeline_mode<synchronous>, transform_indices = @transform_2, window_bounds = array<i64: 1, 512>}, {pipeline_mode = #tpu.pipeline_mode<synchronous>, transform_indices = @transform_3, window_bounds = array<i64: 512, 256>}, {pipeline_mode = #tpu.pipeline_mode<synchronous>, transform_indices = @transform_4, window_bounds = array<i64: 1, 256>}, {pipeline_mode = #tpu.pipeline_mode<synchronous>, transform_indices = @transform_5, window_bounds = array<i64: 256, 128>}, {pipeline_mode = #tpu.pipeline_mode<synchronous>, transform_indices = @transform_6, window_bounds = array<i64: 1, 128>}, {pipeline_mode = #tpu.pipeline_mode<synchronous>, transform_indices = @transform_7, window_bounds = array<i64: 128, 128>}, {pipeline_mode = #tpu.pipeline_mode<synchronous>, transform_indices = @transform_8, window_bounds = array<i64: 1, 128>}, {transform_indices = @transform_9, window_bounds = array<i64: 16, 128>}]} {
    %c0 = arith.constant 0 : index
    %c0_0 = arith.constant 0 : index
    %0 = vector.load %arg1[%c0, %c0_0] : memref<16x1024xbf16, #tpu.memory_space<vmem>>, vector<16x1024xbf16>
    %c0_1 = arith.constant 0 : index
    %c0_2 = arith.constant 0 : index
    %1 = vector.load %arg2[%c0_1, %c0_2] : memref<1024x512xbf16, #tpu.memory_space<vmem>>, vector<1024x512xbf16>
    %cst = arith.constant dense<0.000000e+00> : vector<16x512xf32>
    %2 = tpu.matmul %0, %1, %cst {dimension_numbers = #tpu.dot_dimension_numbers<[1], [0], [0], [1], [0, 0, 1, 1], [], []>} : vector<16x1024xbf16>, vector<1024x512xbf16>, vector<16x512xf32> -> vector<16x512xf32>
    %c0_3 = arith.constant 0 : index
    %c0_4 = arith.constant 0 : index
    %3 = vector.load %arg3[%c0_3, %c0_4] : memref<1x512xf32, #tpu.memory_space<vmem>>, vector<1x512xf32>
    %4 = vector.broadcast %3 : vector<1x512xf32> to vector<16x512xf32>
    %5 = arith.addf %2, %4 : vector<16x512xf32>
    %cst_5 = arith.constant 0.000000e+00 : f32
    %6 = vector.broadcast %cst_5 : f32 to vector<16x512xf32>
    %7 = arith.maximumf %5, %6 : vector<16x512xf32>
    %8 = arith.truncf %7 : vector<16x512xf32> to vector<16x512xbf16>
    %c0_6 = arith.constant 0 : index
    %c0_7 = arith.constant 0 : index
    %9 = vector.load %arg4[%c0_6, %c0_7] : memref<512x256xbf16, #tpu.memory_space<vmem>>, vector<512x256xbf16>
    %cst_8 = arith.constant dense<0.000000e+00> : vector<16x256xf32>
    %10 = tpu.matmul %8, %9, %cst_8 {dimension_numbers = #tpu.dot_dimension_numbers<[1], [0], [0], [1], [0, 0, 1, 1], [], []>} : vector<16x512xbf16>, vector<512x256xbf16>, vector<16x256xf32> -> vector<16x256xf32>
    %c0_9 = arith.constant 0 : index
    %c0_10 = arith.constant 0 : index
    %11 = vector.load %arg5[%c0_9, %c0_10] : memref<1x256xf32, #tpu.memory_space<vmem>>, vector<1x256xf32>
    %12 = vector.broadcast %11 : vector<1x256xf32> to vector<16x256xf32>
    %13 = arith.addf %10, %12 : vector<16x256xf32>
    %cst_11 = arith.constant 0.000000e+00 : f32
    %14 = vector.broadcast %cst_11 : f32 to vector<16x256xf32>
    %15 = arith.maximumf %13, %14 : vector<16x256xf32>
    %16 = arith.truncf %15 : vector<16x256xf32> to vector<16x256xbf16>
    %c0_12 = arith.constant 0 : index
    %c0_13 = arith.constant 0 : index
    %17 = vector.load %arg6[%c0_12, %c0_13] : memref<256x128xbf16, #tpu.memory_space<vmem>>, vector<256x128xbf16>
    %cst_14 = arith.constant dense<0.000000e+00> : vector<16x128xf32>
    %18 = tpu.matmul %16, %17, %cst_14 {dimension_numbers = #tpu.dot_dimension_numbers<[1], [0], [0], [1], [0, 0, 1, 1], [], []>} : vector<16x256xbf16>, vector<256x128xbf16>, vector<16x128xf32> -> vector<16x128xf32>
    %c0_15 = arith.constant 0 : index
    %c0_16 = arith.constant 0 : index
    %19 = vector.load %arg7[%c0_15, %c0_16] : memref<1x128xf32, #tpu.memory_space<vmem>>, vector<1x128xf32>
    %20 = vector.broadcast %19 : vector<1x128xf32> to vector<16x128xf32>
    %21 = arith.addf %18, %20 : vector<16x128xf32>
    %cst_17 = arith.constant 0.000000e+00 : f32
    %22 = vector.broadcast %cst_17 : f32 to vector<16x128xf32>
    %23 = arith.maximumf %21, %22 : vector<16x128xf32>
    %24 = arith.truncf %23 : vector<16x128xf32> to vector<16x128xbf16>
    %c0_18 = arith.constant 0 : index
    %c0_19 = arith.constant 0 : index
    %25 = vector.load %arg8[%c0_18, %c0_19] : memref<128x128xbf16, #tpu.memory_space<vmem>>, vector<128x128xbf16>
    %cst_20 = arith.constant dense<0.000000e+00> : vector<16x128xf32>
    %26 = tpu.matmul %24, %25, %cst_20 {dimension_numbers = #tpu.dot_dimension_numbers<[1], [0], [0], [1], [0, 0, 1, 1], [], []>} : vector<16x128xbf16>, vector<128x128xbf16>, vector<16x128xf32> -> vector<16x128xf32>
    %c0_21 = arith.constant 0 : index
    %c0_22 = arith.constant 0 : index
    %27 = vector.load %arg9[%c0_21, %c0_22] : memref<1x128xf32, #tpu.memory_space<vmem>>, vector<1x128xf32>
    %28 = vector.broadcast %27 : vector<1x128xf32> to vector<16x128xf32>
    %29 = arith.addf %26, %28 : vector<16x128xf32>
    %c0_23 = arith.constant 0 : index
    %c0_24 = arith.constant 0 : index
    %30 = vector.load %arg10[%c0_23, %c0_24] : memref<16x128xf32, #tpu.memory_space<vmem>>, vector<16x128xf32>
    tpu.vector_store %arg10[%c0_23, %c0_24], %29 {strides = array<i32>} : memref<16x128xf32, #tpu.memory_space<vmem>>, vector<16x128xf32>,
    return
  }
  func.func @transform_0(%arg0: i32) -> (i32, i32) {
    %c0_i32 = arith.constant 0 : i32
    %c0_i32_0 = arith.constant 0 : i32
    return %arg0, %c0_i32 : i32, i32
  }
  func.func @transform_1(%arg0: i32) -> (i32, i32) {
    %c0_i32 = arith.constant 0 : i32
    %c0_i32_0 = arith.constant 0 : i32
    %c0_i32_1 = arith.constant 0 : i32
    return %c0_i32, %c0_i32_0 : i32, i32
  }
  func.func @transform_2(%arg0: i32) -> (i32, i32) {
    %c0_i32 = arith.constant 0 : i32
    %c0_i32_0 = arith.constant 0 : i32
    %c0_i32_1 = arith.constant 0 : i32
    return %c0_i32, %c0_i32_0 : i32, i32
  }
  func.func @transform_3(%arg0: i32) -> (i32, i32) {
    %c0_i32 = arith.constant 0 : i32
    %c0_i32_0 = arith.constant 0 : i32
    %c0_i32_1 = arith.constant 0 : i32
    return %c0_i32, %c0_i32_0 : i32, i32
  }
  func.func @transform_4(%arg0: i32) -> (i32, i32) {
    %c0_i32 = arith.constant 0 : i32
    %c0_i32_0 = arith.constant 0 : i32
    %c0_i32_1 = arith.constant 0 : i32
    return %c0_i32, %c0_i32_0 : i32, i32
  }
  func.func @transform_5(%arg0: i32) -> (i32, i32) {
    %c0_i32 = arith.constant 0 : i32
    %c0_i32_0 = arith.constant 0 : i32
    %c0_i32_1 = arith.constant 0 : i32
    return %c0_i32, %c0_i32_0 : i32, i32
  }
  func.func @transform_6(%arg0: i32) -> (i32, i32) {
    %c0_i32 = arith.constant 0 : i32
    %c0_i32_0 = arith.constant 0 : i32
    %c0_i32_1 = arith.constant 0 : i32
    return %c0_i32, %c0_i32_0 : i32, i32
  }
  func.func @transform_7(%arg0: i32) -> (i32, i32) {
    %c0_i32 = arith.constant 0 : i32
    %c0_i32_0 = arith.constant 0 : i32
    %c0_i32_1 = arith.constant 0 : i32
    return %c0_i32, %c0_i32_0 : i32, i32
  }
  func.func @transform_8(%arg0: i32) -> (i32, i32) {
    %c0_i32 = arith.constant 0 : i32
    %c0_i32_0 = arith.constant 0 : i32
    %c0_i32_1 = arith.constant 0 : i32
    return %c0_i32, %c0_i32_0 : i32, i32
  }
  func.func @transform_9(%arg0: i32) -> (i32, i32) {
    %c0_i32 = arith.constant 0 : i32
    %c0_i32_0 = arith.constant 0 : i32
    return %arg0, %c0_i32 : i32, i32
  }
}

</mosaic_0001>

<llo_original>
// kernel: tpu_custom_call.1
$region0: #{tpu_custom_call.1}
  #allocation0 [shape = 'u32[]', space=smem, size = 0x4, offset = 0x4, fixed_abs, tag = 'smem constant byte address 0x4 - core index']
  #allocation1 [shape = 'u32[144,128]{1,0:T(1,128)}', space=vmem, size = 0x12000, scoped, tag = 'internal scratch']
  %s0 = inlined_call_operand.hbm [shape: bf16[16,1024], index: 0, kind: input, shape index: {}]
  %s1 = inlined_call_operand.hbm [shape: bf16[1024,512], index: 1, kind: input, shape index: {}]
  %s2 = inlined_call_operand.vmem [shape: f32[1,512], index: 2, kind: input, shape index: {}]
  %s3 = inlined_call_operand.hbm [shape: bf16[512,256], index: 3, kind: input, shape index: {}]
  %s4 = inlined_call_operand.vmem [shape: f32[1,256], index: 4, kind: input, shape index: {}]
  %s5 = inlined_call_operand.hbm [shape: bf16[256,128], index: 5, kind: input, shape index: {}]
  %s6 = inlined_call_operand.vmem [shape: f32[1,128], index: 6, kind: input, shape index: {}]
  %s7 = inlined_call_operand.hbm [shape: bf16[128,128], index: 7, kind: input, shape index: {}]
  %s8 = inlined_call_operand.vmem [shape: f32[1,128], index: 8, kind: input, shape index: {}]
  %s9 = inlined_call_operand.hbm [shape: f32[16,128], index: 9, kind: output, shape index: {}]
  %s10 = sld [smem:[#allocation0]]
  $region66: #{tpu_custom_call.1} parent=0
    _
  %s12 = ssub.s32 1, %s10
  %s13 = scalar_select 0, %s12, %s10
  $region1: #{tpu_custom_call.1} parent=0
    #allocation2 [shape = 'u8[32768]{0}', space=vmem, size = 0x8000, scoped, tag = 'input window, operand 0, single buffered']
    #allocation3 [shape = 's32[1]{0}', space=sflag, size = 0x4, scoped, tag = 'scoped memory for tpu_custom_call.1']
    #allocation4 [shape = 's32[1]{0}', space=sflag, size = 0x4, scoped, tag = 'scoped memory for tpu_custom_call.1']
    #allocation5 [shape = 'u8[1048576]{0}', space=vmem, size = 0x100000, scoped, tag = 'input window, operand 1, single buffered']
    #allocation6 [shape = 's32[1]{0}', space=sflag, size = 0x4, scoped, tag = 'scoped memory for tpu_custom_call.1']
    #allocation7 [shape = 'u8[262144]{0}', space=vmem, size = 0x40000, scoped, tag = 'input window, operand 3, single buffered']
    #allocation8 [shape = 'u8[65536]{0}', space=vmem, size = 0x10000, scoped, tag = 'input window, operand 5, single buffered']
    #allocation9 [shape = 's32[1]{0}', space=sflag, size = 0x4, scoped, tag = 'scoped memory for tpu_custom_call.1']
    #allocation10 [shape = 'u8[32768]{0}', space=vmem, size = 0x8000, scoped, tag = 'input window, operand 7, single buffered']
    #allocation11 [shape = 'u8[8192]{0}', space=vmem, size = 0x2000, scoped, tag = 'output window, operand 0, single buffered']
    %14 = vsyncpa [#allocation3], 0
    %15 = vsyncpa [#allocation6], 0
    %16 = vsyncpa [#allocation9], 0
    %17 = vsyncpa [#allocation4], 0
    // Predicated region
    $region2: #{tpu_custom_call.1} parent=1 // pred_check
      _
    $region3: #{tpu_custom_call.1} parent=1 // pred_check_branch
      %19 = sbr.rel (0) target = $region5
    $region4: #{tpu_custom_call.1} parent=1 // pred_region
      %s21 = ssub.s32 1024, 1024
      %22 = vsyncadd [#allocation3], %s21
      %s23 = sshll.u32 [#allocation2], 4
      %s24 = int_to_ptr.vmem [resolvable:$true] %s23
      %29 = dma.hbm_to_vmem [thread:$0]  %s0, 1024, %s24, [#allocation3], 512, 512, 32
    $region5: #{tpu_custom_call.1} parent=1 // pred_fallthru
      _
    // Predicated region
    $region6: #{tpu_custom_call.1} parent=1 // pred_check
      _
    $region7: #{tpu_custom_call.1} parent=1 // pred_check_branch
      %31 = sbr.rel (0) target = $region9
    $region8: #{tpu_custom_call.1} parent=1 // pred_region
      %s33 = ssub.s32 32768, 32768
      %34 = vsyncadd [#allocation6], %s33
      %s35 = sshll.u32 [#allocation5], 4
      %s36 = int_to_ptr.vmem [resolvable:$true] %s35
      %41 = dma.hbm_to_vmem [thread:$0]  %s1, 32768, %s36, [#allocation6], 256, 256, 16
    $region9: #{tpu_custom_call.1} parent=1 // pred_fallthru
      _
    // Predicated region
    $region10: #{tpu_custom_call.1} parent=1 // pred_check
      _
    $region11: #{tpu_custom_call.1} parent=1 // pred_check_branch
      %43 = sbr.rel (0) target = $region13
    $region12: #{tpu_custom_call.1} parent=1 // pred_region
      _
    $region13: #{tpu_custom_call.1} parent=1 // pred_fallthru
      _
    // Predicated region
    $region14: #{tpu_custom_call.1} parent=1 // pred_check
      _
    $region15: #{tpu_custom_call.1} parent=1 // pred_check_branch
      %45 = sbr.rel (0) target = $region17
    $region16: #{tpu_custom_call.1} parent=1 // pred_region
      %s47 = ssub.s32 8192, 8192
      %48 = vsyncadd [#allocation6], %s47
      %s49 = sshll.u32 [#allocation7], 4
      %s50 = int_to_ptr.vmem [resolvable:$true] %s49
      %55 = dma.hbm_to_vmem [thread:$0]  %s3, 8192, %s50, [#allocation6], 128, 128, 8
    $region17: #{tpu_custom_call.1} parent=1 // pred_fallthru
      _
    // Predicated region
    $region18: #{tpu_custom_call.1} parent=1 // pred_check
      _
    $region19: #{tpu_custom_call.1} parent=1 // pred_check_branch
      %57 = sbr.rel (0) target = $region21
    $region20: #{tpu_custom_call.1} parent=1 // pred_region
      _
    $region21: #{tpu_custom_call.1} parent=1 // pred_fallthru
      _
    // Predicated region
    $region22: #{tpu_custom_call.1} parent=1 // pred_check
      _
    $region23: #{tpu_custom_call.1} parent=1 // pred_check_branch
      %59 = sbr.rel (0) target = $region25
    $region24: #{tpu_custom_call.1} parent=1 // pred_region
      %s61 = ssub.s32 2048, 2048
      %62 = vsyncadd [#allocation9], %s61
      %s63 = sshll.u32 [#allocation8], 4
      %s64 = int_to_ptr.vmem [resolvable:$true] %s63
      %69 = dma.hbm_to_vmem [thread:$0]  %s5, 2048, %s64, [#allocation9], 64, 64, 4
    $region25: #{tpu_custom_call.1} parent=1 // pred_fallthru
      _
    // Predicated region
    $region26: #{tpu_custom_call.1} parent=1 // pred_check
      _
    $region27: #{tpu_custom_call.1} parent=1 // pred_check_branch
      %71 = sbr.rel (0) target = $region29
    $region28: #{tpu_custom_call.1} parent=1 // pred_region
      _
    $region29: #{tpu_custom_call.1} parent=1 // pred_fallthru
      _
    // Predicated region
    $region30: #{tpu_custom_call.1} parent=1 // pred_check
      _
    $region31: #{tpu_custom_call.1} parent=1 // pred_check_branch
      %73 = sbr.rel (0) target = $region33
    $region32: #{tpu_custom_call.1} parent=1 // pred_region
      %s75 = ssub.s32 1024, 1024
      %76 = vsyncadd [#allocation9], %s75
      %s77 = sshll.u32 [#allocation10], 4
      %s78 = int_to_ptr.vmem [resolvable:$true] %s77
      %83 = dma.hbm_to_vmem [thread:$0]  %s7, 1024, %s78, [#allocation9], 64, 64, 4
    $region33: #{tpu_custom_call.1} parent=1 // pred_fallthru
      _
    // Predicated region
    $region34: #{tpu_custom_call.1} parent=1 // pred_check
      _
    $region35: #{tpu_custom_call.1} parent=1 // pred_check_branch
      %85 = sbr.rel (0) target = $region37
    $region36: #{tpu_custom_call.1} parent=1 // pred_region
      _
    $region37: #{tpu_custom_call.1} parent=1 // pred_fallthru
      _
    // Predicated region
    $region38: #{tpu_custom_call.1} parent=1 // pred_check
      _
    $region39: #{tpu_custom_call.1} parent=1 // pred_check_branch
      %87 = sbr.rel (0) target = $region41
    $region40: #{tpu_custom_call.1} parent=1 // pred_region
      %88 = dma.done [#allocation3], 1024
    $region41: #{tpu_custom_call.1} parent=1 // pred_fallthru
      _
    // Predicated region
    $region42: #{tpu_custom_call.1} parent=1 // pred_check
      _
    $region43: #{tpu_custom_call.1} parent=1 // pred_check_branch
      %90 = sbr.rel (0) target = $region45
    $region44: #{tpu_custom_call.1} parent=1 // pred_region
      %91 = dma.done [#allocation6], 32768
    $region45: #{tpu_custom_call.1} parent=1 // pred_fallthru
      _
    // Predicated region
    $region46: #{tpu_custom_call.1} parent=1 // pred_check
      _
    $region47: #{tpu_custom_call.1} parent=1 // pred_check_branch
      %93 = sbr.rel (0) target = $region49
    $region48: #{tpu_custom_call.1} parent=1 // pred_region
      %94 = dma.done [#allocation6], 8192
    $region49: #{tpu_custom_call.1} parent=1 // pred_fallthru
      _
    // Predicated region
    $region50: #{tpu_custom_call.1} parent=1 // pred_check
      _
    $region51: #{tpu_custom_call.1} parent=1 // pred_check_branch
      %96 = sbr.rel (0) target = $region53
    $region52: #{tpu_custom_call.1} parent=1 // pred_region
      %97 = dma.done [#allocation9], 2048
    $region53: #{tpu_custom_call.1} parent=1 // pred_fallthru
      _
    // Predicated region
    $region54: #{tpu_custom_call.1} parent=1 // pred_check
      _
    $region55: #{tpu_custom_call.1} parent=1 // pred_check_branch
      %99 = sbr.rel (0) target = $region57
    $region56: #{tpu_custom_call.1} parent=1 // pred_region
      %100 = dma.done [#allocation9], 1024
    $region57: #{tpu_custom_call.1} parent=1 // pred_fallthru
      _
    %v102 = vld [vmem:[#allocation2] sm:$0xff]
    %v103 = vld [vmem:[#allocation2 + $0x8] sm:$0xff]
    %v104 = vld [vmem:[#allocation2 + $0x10] sm:$0xff]
    %v105 = vld [vmem:[#allocation2 + $0x18] sm:$0xff]
    %v106 = vld [vmem:[#allocation2 + $0x20] sm:$0xff]
    %v107 = vld [vmem:[#allocation2 + $0x28] sm:$0xff]
    %v108 = vld [vmem:[#allocation2 + $0x30] sm:$0xff]
    %v109 = vld [vmem:[#allocation2 + $0x38] sm:$0xff]
    %v110 = vld [vmem:[#allocation5] sm:$0xff]
    %v111 = vld [vmem:[#allocation5 + $0x8] sm:$0xff]
    %v112 = vld [vmem:[#allocation5 + $0x10] sm:$0xff]
    %v113 = vld [vmem:[#allocation5 + $0x18] sm:$0xff]
    %v114 = vld [vmem:[#allocation5 + $0x20] sm:$0xff]
    %v115 = vld [vmem:[#allocation5 + $0x28] sm:$0xff]
    %v116 = vld [vmem:[#allocation5 + $0x30] sm:$0xff]
    %v117 = vld [vmem:[#allocation5 + $0x38] sm:$0xff]
    %v118 = vld [vmem:[#allocation5 + $0x40] sm:$0xff]
    %v119 = vld [vmem:[#allocation5 + $0x48] sm:$0xff]
    %v120 = vld [vmem:[#allocation5 + $0x50] sm:$0xff]
    %v121 = vld [vmem:[#allocation5 + $0x58] sm:$0xff]
    %v122 = vld [vmem:[#allocation5 + $0x60] sm:$0xff]
    %v123 = vld [vmem:[#allocation5 + $0x68] sm:$0xff]
    %v124 = vld [vmem:[#allocation5 + $0x70] sm:$0xff]
    %v125 = vld [vmem:[#allocation5 + $0x78] sm:$0xff]
    %v126 = vld [vmem:[#allocation5 + $0x80] sm:$0xff]
    %v127 = vld [vmem:[#allocation5 + $0x88] sm:$0xff]
    %v128 = vld [vmem:[#allocation5 + $0x90] sm:$0xff]
    %v129 = vld [vmem:[#allocation5 + $0x98] sm:$0xff]
    %v130 = vld [vmem:[#allocation5 + $0xa0] sm:$0xff]
    %v131 = vld [vmem:[#allocation5 + $0xa8] sm:$0xff]
    %v132 = vld [vmem:[#allocation5 + $0xb0] sm:$0xff]
    %v133 = vld [vmem:[#allocation5 + $0xb8] sm:$0xff]
    %v134 = vld [vmem:[#allocation5 + $0xc0] sm:$0xff]
    %v135 = vld [vmem:[#allocation5 + $0xc8] sm:$0xff]
    %v136 = vld [vmem:[#allocation5 + $0xd0] sm:$0xff]
    %v137 = vld [vmem:[#allocation5 + $0xd8] sm:$0xff]
    %v138 = vld [vmem:[#allocation5 + $0xe0] sm:$0xff]
    %v139 = vld [vmem:[#allocation5 + $0xe8] sm:$0xff]
    %v140 = vld [vmem:[#allocation5 + $0xf0] sm:$0xff]
    %v141 = vld [vmem:[#allocation5 + $0xf8] sm:$0xff]
    %v142 = vld [vmem:[#allocation5 + $0x100] sm:$0xff]
    %v143 = vld [vmem:[#allocation5 + $0x108] sm:$0xff]
    %v144 = vld [vmem:[#allocation5 + $0x110] sm:$0xff]
    %v145 = vld [vmem:[#allocation5 + $0x118] sm:$0xff]
    %v146 = vld [vmem:[#allocation5 + $0x120] sm:$0xff]
    %v147 = vld [vmem:[#allocation5 + $0x128] sm:$0xff]
    %v148 = vld [vmem:[#allocation5 + $0x130] sm:$0xff]
    %v149 = vld [vmem:[#allocation5 + $0x138] sm:$0xff]
    %v150 = vld [vmem:[#allocation5 + $0x140] sm:$0xff]
    %v151 = vld [vmem:[#allocation5 + $0x148] sm:$0xff]
    %v152 = vld [vmem:[#allocation5 + $0x150] sm:$0xff]
    %v153 = vld [vmem:[#allocation5 + $0x158] sm:$0xff]
    %v154 = vld [vmem:[#allocation5 + $0x160] sm:$0xff]
    %v155 = vld [vmem:[#allocation5 + $0x168] sm:$0xff]
    %v156 = vld [vmem:[#allocation5 + $0x170] sm:$0xff]
    %v157 = vld [vmem:[#allocation5 + $0x178] sm:$0xff]
    %v158 = vld [vmem:[#allocation5 + $0x180] sm:$0xff]
    %v159 = vld [vmem:[#allocation5 + $0x188] sm:$0xff]
    %v160 = vld [vmem:[#allocation5 + $0x190] sm:$0xff]
    %v161 = vld [vmem:[#allocation5 + $0x198] sm:$0xff]
    %v162 = vld [vmem:[#allocation5 + $0x1a0] sm:$0xff]
    %v163 = vld [vmem:[#allocation5 + $0x1a8] sm:$0xff]
    %v164 = vld [vmem:[#allocation5 + $0x1b0] sm:$0xff]
    %v165 = vld [vmem:[#allocation5 + $0x1b8] sm:$0xff]
    %v166 = vld [vmem:[#allocation5 + $0x1c0] sm:$0xff]
    %v167 = vld [vmem:[#allocation5 + $0x1c8] sm:$0xff]
    %v168 = vld [vmem:[#allocation5 + $0x1d0] sm:$0xff]
    %v169 = vld [vmem:[#allocation5 + $0x1d8] sm:$0xff]
    %v170 = vld [vmem:[#allocation5 + $0x1e0] sm:$0xff]
    %v171 = vld [vmem:[#allocation5 + $0x1e8] sm:$0xff]
    %v172 = vld [vmem:[#allocation5 + $0x1f0] sm:$0xff]
    %v173 = vld [vmem:[#allocation5 + $0x1f8] sm:$0xff]
    %v174 = vld [vmem:[#allocation5 + $0x200] sm:$0xff]
    %v175 = vld [vmem:[#allocation5 + $0x208] sm:$0xff]
    %v176 = vld [vmem:[#allocation5 + $0x210] sm:$0xff]
    %v177 = vld [vmem:[#allocation5 + $0x218] sm:$0xff]
    %v178 = vld [vmem:[#allocation5 + $0x220] sm:$0xff]
    %v179 = vld [vmem:[#allocation5 + $0x228] sm:$0xff]
    %v180 = vld [vmem:[#allocation5 + $0x230] sm:$0xff]
    %v181 = vld [vmem:[#allocation5 + $0x238] sm:$0xff]
    %v182 = vld [vmem:[#allocation5 + $0x240] sm:$0xff]
    %v183 = vld [vmem:[#allocation5 + $0x248] sm:$0xff]
    %v184 = vld [vmem:[#allocation5 + $0x250] sm:$0xff]
    %v185 = vld [vmem:[#allocation5 + $0x258] sm:$0xff]
    %v186 = vld [vmem:[#allocation5 + $0x260] sm:$0xff]
    %v187 = vld [vmem:[#allocation5 + $0x268] sm:$0xff]
    %v188 = vld [vmem:[#allocation5 + $0x270] sm:$0xff]
    %v189 = vld [vmem:[#allocation5 + $0x278] sm:$0xff]
    %v190 = vld [vmem:[#allocation5 + $0x280] sm:$0xff]
    %v191 = vld [vmem:[#allocation5 + $0x288] sm:$0xff]
    %v192 = vld [vmem:[#allocation5 + $0x290] sm:$0xff]
    %v193 = vld [vmem:[#allocation5 + $0x298] sm:$0xff]
    %v194 = vld [vmem:[#allocation5 + $0x2a0] sm:$0xff]
    %v195 = vld [vmem:[#allocation5 + $0x2a8] sm:$0xff]
    %v196 = vld [vmem:[#allocation5 + $0x2b0] sm:$0xff]
    %v197 = vld [vmem:[#allocation5 + $0x2b8] sm:$0xff]
    %v198 = vld [vmem:[#allocation5 + $0x2c0] sm:$0xff]
    %v199 = vld [vmem:[#allocation5 + $0x2c8] sm:$0xff]
    %v200 = vld [vmem:[#allocation5 + $0x2d0] sm:$0xff]
    %v201 = vld [vmem:[#allocation5 + $0x2d8] sm:$0xff]
    %v202 = vld [vmem:[#allocation5 + $0x2e0] sm:$0xff]
    %v203 = vld [vmem:[#allocation5 + $0x2e8] sm:$0xff]
    %v204 = vld [vmem:[#allocation5 + $0x2f0] sm:$0xff]
    %v205 = vld [vmem:[#allocation5 + $0x2f8] sm:$0xff]
    %v206 = vld [vmem:[#allocation5 + $0x300] sm:$0xff]
    %v207 = vld [vmem:[#allocation5 + $0x308] sm:$0xff]
    %v208 = vld [vmem:[#allocation5 + $0x310] sm:$0xff]
    %v209 = vld [vmem:[#allocation5 + $0x318] sm:$0xff]
    %v210 = vld [vmem:[#allocation5 + $0x320] sm:$0xff]
    %v211 = vld [vmem:[#allocation5 + $0x328] sm:$0xff]
    %v212 = vld [vmem:[#allocation5 + $0x330] sm:$0xff]
    %v213 = vld [vmem:[#allocation5 + $0x338] sm:$0xff]
    %v214 = vld [vmem:[#allocation5 + $0x340] sm:$0xff]
    %v215 = vld [vmem:[#allocation5 + $0x348] sm:$0xff]
    %v216 = vld [vmem:[#allocation5 + $0x350] sm:$0xff]
    %v217 = vld [vmem:[#allocation5 + $0x358] sm:$0xff]
    %v218 = vld [vmem:[#allocation5 + $0x360] sm:$0xff]
    %v219 = vld [vmem:[#allocation5 + $0x368] sm:$0xff]
    %v220 = vld [vmem:[#allocation5 + $0x370] sm:$0xff]
    %v221 = vld [vmem:[#allocation5 + $0x378] sm:$0xff]
    %v222 = vld [vmem:[#allocation5 + $0x380] sm:$0xff]
    %v223 = vld [vmem:[#allocation5 + $0x388] sm:$0xff]
    %v224 = vld [vmem:[#allocation5 + $0x390] sm:$0xff]
    %v225 = vld [vmem:[#allocation5 + $0x398] sm:$0xff]
    %v226 = vld [vmem:[#allocation5 + $0x3a0] sm:$0xff]
    %v227 = vld [vmem:[#allocation5 + $0x3a8] sm:$0xff]
    %v228 = vld [vmem:[#allocation5 + $0x3b0] sm:$0xff]
    %v229 = vld [vmem:[#allocation5 + $0x3b8] sm:$0xff]
    %v230 = vld [vmem:[#allocation5 + $0x3c0] sm:$0xff]
    %v231 = vld [vmem:[#allocation5 + $0x3c8] sm:$0xff]
    %v232 = vld [vmem:[#allocation5 + $0x3d0] sm:$0xff]
    %v233 = vld [vmem:[#allocation5 + $0x3d8] sm:$0xff]
    %v234 = vld [vmem:[#allocation5 + $0x3e0] sm:$0xff]
    %v235 = vld [vmem:[#allocation5 + $0x3e8] sm:$0xff]
    %v236 = vld [vmem:[#allocation5 + $0x3f0] sm:$0xff]
    %v237 = vld [vmem:[#allocation5 + $0x3f8] sm:$0xff]
    %v238 = vld [vmem:[#allocation5 + $0x400] sm:$0xff]
    %v239 = vld [vmem:[#allocation5 + $0x408] sm:$0xff]
    %v240 = vld [vmem:[#allocation5 + $0x410] sm:$0xff]
    %v241 = vld [vmem:[#allocation5 + $0x418] sm:$0xff]
    %v242 = vld [vmem:[#allocation5 + $0x420] sm:$0xff]
    %v243 = vld [vmem:[#allocation5 + $0x428] sm:$0xff]
    %v244 = vld [vmem:[#allocation5 + $0x430] sm:$0xff]
    %v245 = vld [vmem:[#allocation5 + $0x438] sm:$0xff]
    %v246 = vld [vmem:[#allocation5 + $0x440] sm:$0xff]
    %v247 = vld [vmem:[#allocation5 + $0x448] sm:$0xff]
    %v248 = vld [vmem:[#allocation5 + $0x450] sm:$0xff]
    %v249 = vld [vmem:[#allocation5 + $0x458] sm:$0xff]
    %v250 = vld [vmem:[#allocation5 + $0x460] sm:$0xff]
    %v251 = vld [vmem:[#allocation5 + $0x468] sm:$0xff]
    %v252 = vld [vmem:[#allocation5 + $0x470] sm:$0xff]
    %v253 = vld [vmem:[#allocation5 + $0x478] sm:$0xff]
    %v254 = vld [vmem:[#allocation5 + $0x480] sm:$0xff]
    %v255 = vld [vmem:[#allocation5 + $0x488] sm:$0xff]
    %v256 = vld [vmem:[#allocation5 + $0x490] sm:$0xff]
    %v257 = vld [vmem:[#allocation5 + $0x498] sm:$0xff]
    %v258 = vld [vmem:[#allocation5 + $0x4a0] sm:$0xff]
    %v259 = vld [vmem:[#allocation5 + $0x4a8] sm:$0xff]
    %v260 = vld [vmem:[#allocation5 + $0x4b0] sm:$0xff]
    %v261 = vld [vmem:[#allocation5 + $0x4b8] sm:$0xff]
    %v262 = vld [vmem:[#allocation5 + $0x4c0] sm:$0xff]
    %v263 = vld [vmem:[#allocation5 + $0x4c8] sm:$0xff]
    %v264 = vld [vmem:[#allocation5 + $0x4d0] sm:$0xff]
    %v265 = vld [vmem:[#allocation5 + $0x4d8] sm:$0xff]
    %v266 = vld [vmem:[#allocation5 + $0x4e0] sm:$0xff]
    %v267 = vld [vmem:[#allocation5 + $0x4e8] sm:$0xff]
    %v268 = vld [vmem:[#allocation5 + $0x4f0] sm:$0xff]
    %v269 = vld [vmem:[#allocation5 + $0x4f8] sm:$0xff]
    %v270 = vld [vmem:[#allocation5 + $0x500] sm:$0xff]
    %v271 = vld [vmem:[#allocation5 + $0x508] sm:$0xff]
    %v272 = vld [vmem:[#allocation5 + $0x510] sm:$0xff]
    %v273 = vld [vmem:[#allocation5 + $0x518] sm:$0xff]
    %v274 = vld [vmem:[#allocation5 + $0x520] sm:$0xff]
    %v275 = vld [vmem:[#allocation5 + $0x528] sm:$0xff]
    %v276 = vld [vmem:[#allocation5 + $0x530] sm:$0xff]
    %v277 = vld [vmem:[#allocation5 + $0x538] sm:$0xff]
    %v278 = vld [vmem:[#allocation5 + $0x540] sm:$0xff]
    %v279 = vld [vmem:[#allocation5 + $0x548] sm:$0xff]
    %v280 = vld [vmem:[#allocation5 + $0x550] sm:$0xff]
    %v281 = vld [vmem:[#allocation5 + $0x558] sm:$0xff]
    %v282 = vld [vmem:[#allocation5 + $0x560] sm:$0xff]
    %v283 = vld [vmem:[#allocation5 + $0x568] sm:$0xff]
    %v284 = vld [vmem:[#allocation5 + $0x570] sm:$0xff]
    %v285 = vld [vmem:[#allocation5 + $0x578] sm:$0xff]
    %v286 = vld [vmem:[#allocation5 + $0x580] sm:$0xff]
    %v287 = vld [vmem:[#allocation5 + $0x588] sm:$0xff]
    %v288 = vld [vmem:[#allocation5 + $0x590] sm:$0xff]
    %v289 = vld [vmem:[#allocation5 + $0x598] sm:$0xff]
    %v290 = vld [vmem:[#allocation5 + $0x5a0] sm:$0xff]
    %v291 = vld [vmem:[#allocation5 + $0x5a8] sm:$0xff]
    %v292 = vld [vmem:[#allocation5 + $0x5b0] sm:$0xff]
    %v293 = vld [vmem:[#allocation5 + $0x5b8] sm:$0xff]
    %v294 = vld [vmem:[#allocation5 + $0x5c0] sm:$0xff]
    %v295 = vld [vmem:[#allocation5 + $0x5c8] sm:$0xff]
    %v296 = vld [vmem:[#allocation5 + $0x5d0] sm:$0xff]
    %v297 = vld [vmem:[#allocation5 + $0x5d8] sm:$0xff]
    %v298 = vld [vmem:[#allocation5 + $0x5e0] sm:$0xff]
    %v299 = vld [vmem:[#allocation5 + $0x5e8] sm:$0xff]
    %v300 = vld [vmem:[#allocation5 + $0x5f0] sm:$0xff]
    %v301 = vld [vmem:[#allocation5 + $0x5f8] sm:$0xff]
    %v302 = vld [vmem:[#allocation5 + $0x600] sm:$0xff]
    %v303 = vld [vmem:[#allocation5 + $0x608] sm:$0xff]
    %v304 = vld [vmem:[#allocation5 + $0x610] sm:$0xff]
    %v305 = vld [vmem:[#allocation5 + $0x618] sm:$0xff]
    %v306 = vld [vmem:[#allocation5 + $0x620] sm:$0xff]
    %v307 = vld [vmem:[#allocation5 + $0x628] sm:$0xff]
    %v308 = vld [vmem:[#allocation5 + $0x630] sm:$0xff]
    %v309 = vld [vmem:[#allocation5 + $0x638] sm:$0xff]
    %v310 = vld [vmem:[#allocation5 + $0x640] sm:$0xff]
    %v311 = vld [vmem:[#allocation5 + $0x648] sm:$0xff]
    %v312 = vld [vmem:[#allocation5 + $0x650] sm:$0xff]
    %v313 = vld [vmem:[#allocation5 + $0x658] sm:$0xff]
    %v314 = vld [vmem:[#allocation5 + $0x660] sm:$0xff]
    %v315 = vld [vmem:[#allocation5 + $0x668] sm:$0xff]
    %v316 = vld [vmem:[#allocation5 + $0x670] sm:$0xff]
    %v317 = vld [vmem:[#allocation5 + $0x678] sm:$0xff]
    %v318 = vld [vmem:[#allocation5 + $0x680] sm:$0xff]
    %v319 = vld [vmem:[#allocation5 + $0x688] sm:$0xff]
    %v320 = vld [vmem:[#allocation5 + $0x690] sm:$0xff]
    %v321 = vld [vmem:[#allocation5 + $0x698] sm:$0xff]
    %v322 = vld [vmem:[#allocation5 + $0x6a0] sm:$0xff]
    %v323 = vld [vmem:[#allocation5 + $0x6a8] sm:$0xff]
    %v324 = vld [vmem:[#allocation5 + $0x6b0] sm:$0xff]
    %v325 = vld [vmem:[#allocation5 + $0x6b8] sm:$0xff]
    %v326 = vld [vmem:[#allocation5 + $0x6c0] sm:$0xff]
    %v327 = vld [vmem:[#allocation5 + $0x6c8] sm:$0xff]
    %v328 = vld [vmem:[#allocation5 + $0x6d0] sm:$0xff]
    %v329 = vld [vmem:[#allocation5 + $0x6d8] sm:$0xff]
    %v330 = vld [vmem:[#allocation5 + $0x6e0] sm:$0xff]
    %v331 = vld [vmem:[#allocation5 + $0x6e8] sm:$0xff]
    %v332 = vld [vmem:[#allocation5 + $0x6f0] sm:$0xff]
    %v333 = vld [vmem:[#allocation5 + $0x6f8] sm:$0xff]
    %v334 = vld [vmem:[#allocation5 + $0x700] sm:$0xff]
    %v335 = vld [vmem:[#allocation5 + $0x708] sm:$0xff]
    %v336 = vld [vmem:[#allocation5 + $0x710] sm:$0xff]
    %v337 = vld [vmem:[#allocation5 + $0x718] sm:$0xff]
    %v338 = vld [vmem:[#allocation5 + $0x720] sm:$0xff]
    %v339 = vld [vmem:[#allocation5 + $0x728] sm:$0xff]
    %v340 = vld [vmem:[#allocation5 + $0x730] sm:$0xff]
    %v341 = vld [vmem:[#allocation5 + $0x738] sm:$0xff]
    %v342 = vld [vmem:[#allocation5 + $0x740] sm:$0xff]
    %v343 = vld [vmem:[#allocation5 + $0x748] sm:$0xff]
    %v344 = vld [vmem:[#allocation5 + $0x750] sm:$0xff]
    %v345 = vld [vmem:[#allocation5 + $0x758] sm:$0xff]
    %v346 = vld [vmem:[#allocation5 + $0x760] sm:$0xff]
    %v347 = vld [vmem:[#allocation5 + $0x768] sm:$0xff]
    %v348 = vld [vmem:[#allocation5 + $0x770] sm:$0xff]
    %v349 = vld [vmem:[#allocation5 + $0x778] sm:$0xff]
    %v350 = vld [vmem:[#allocation5 + $0x780] sm:$0xff]
    %v351 = vld [vmem:[#allocation5 + $0x788] sm:$0xff]
    %v352 = vld [vmem:[#allocation5 + $0x790] sm:$0xff]
    %v353 = vld [vmem:[#allocation5 + $0x798] sm:$0xff]
    %v354 = vld [vmem:[#allocation5 + $0x7a0] sm:$0xff]
    %v355 = vld [vmem:[#allocation5 + $0x7a8] sm:$0xff]
    %v356 = vld [vmem:[#allocation5 + $0x7b0] sm:$0xff]
    %v357 = vld [vmem:[#allocation5 + $0x7b8] sm:$0xff]
    %v358 = vld [vmem:[#allocation5 + $0x7c0] sm:$0xff]
    %v359 = vld [vmem:[#allocation5 + $0x7c8] sm:$0xff]
    %v360 = vld [vmem:[#allocation5 + $0x7d0] sm:$0xff]
    %v361 = vld [vmem:[#allocation5 + $0x7d8] sm:$0xff]
    %v362 = vld [vmem:[#allocation5 + $0x7e0] sm:$0xff]
    %v363 = vld [vmem:[#allocation5 + $0x7e8] sm:$0xff]
    %v364 = vld [vmem:[#allocation5 + $0x7f0] sm:$0xff]
    %v365 = vld [vmem:[#allocation5 + $0x7f8] sm:$0xff]
    %v366 = vld [vmem:[%s2] sm:$0xf]
    %v368 = vlaneseq
    %v369 = vshrl.u32 %v368, 7
    %v370 = vsub.s32 0, %v369
    %v371 = vrot.slane %v366, %v370
    %v372 = vlaneseq
    %v373 = vshrl.u32 %v372, 7
    %v374 = vsub.s32 1, %v373
    %v375 = vrot.slane %v366, %v374
    %v376 = vlaneseq
    %v377 = vshrl.u32 %v376, 7
    %v378 = vsub.s32 2, %v377
    %v379 = vrot.slane %v366, %v378
    %v380 = vlaneseq
    %v381 = vshrl.u32 %v380, 7
    %v382 = vsub.s32 3, %v381
    %v383 = vrot.slane %v366, %v382
    %v396 = vunpack.c.l.b16 %v102
    %v397 = vunpack.c.h.b16 %v102
    %v398 = vunpack.c.l.b16 %v103
    %v399 = vunpack.c.h.b16 %v103
    %v400 = vunpack.c.l.b16 %v104
    %v401 = vunpack.c.h.b16 %v104
    %v402 = vunpack.c.l.b16 %v105
    %v403 = vunpack.c.h.b16 %v105
    %v404 = vunpack.c.l.b16 %v106
    %v405 = vunpack.c.h.b16 %v106
    %v406 = vunpack.c.l.b16 %v107
    %v407 = vunpack.c.h.b16 %v107
    %v408 = vunpack.c.l.b16 %v108
    %v409 = vunpack.c.h.b16 %v108
    %v410 = vunpack.c.l.b16 %v109
    %v411 = vunpack.c.h.b16 %v109
    %v412 = vpack.c.b16 %v404, %v396
    %v413 = vpack.c.b16 %v405, %v397
    %v414 = vpack.c.b16 %v406, %v398
    %v415 = vpack.c.b16 %v407, %v399
    %v416 = vpack.c.b16 %v408, %v400
    %v417 = vpack.c.b16 %v409, %v401
    %v418 = vpack.c.b16 %v410, %v402
    %v419 = vpack.c.b16 %v411, %v403
    %v684 = vunpack.c.l.b16 %v110
    %v685 = vunpack.c.h.b16 %v110
    %v686 = vunpack.c.l.b16 %v111
    %v687 = vunpack.c.h.b16 %v111
    %v688 = vunpack.c.l.b16 %v112
    %v689 = vunpack.c.h.b16 %v112
    %v690 = vunpack.c.l.b16 %v113
    %v691 = vunpack.c.h.b16 %v113
    %v692 = vunpack.c.l.b16 %v114
    %v693 = vunpack.c.h.b16 %v114
    %v694 = vunpack.c.l.b16 %v115
    %v695 = vunpack.c.h.b16 %v115
    %v696 = vunpack.c.l.b16 %v116
    %v697 = vunpack.c.h.b16 %v116
    %v698 = vunpack.c.l.b16 %v117
    %v699 = vunpack.c.h.b16 %v117
    %v700 = vunpack.c.l.b16 %v118
    %v701 = vunpack.c.h.b16 %v118
    %v702 = vunpack.c.l.b16 %v119
    %v703 = vunpack.c.h.b16 %v119
    %v704 = vunpack.c.l.b16 %v120
    %v705 = vunpack.c.h.b16 %v120
    %v706 = vunpack.c.l.b16 %v121
    %v707 = vunpack.c.h.b16 %v121
    %v708 = vunpack.c.l.b16 %v122
    %v709 = vunpack.c.h.b16 %v122
    %v710 = vunpack.c.l.b16 %v123
    %v711 = vunpack.c.h.b16 %v123
    %v712 = vunpack.c.l.b16 %v124
    %v713 = vunpack.c.h.b16 %v124
    %v714 = vunpack.c.l.b16 %v125
    %v715 = vunpack.c.h.b16 %v125
    %v716 = vunpack.c.l.b16 %v126
    %v717 = vunpack.c.h.b16 %v126
    %v718 = vunpack.c.l.b16 %v127
    %v719 = vunpack.c.h.b16 %v127
    %v720 = vunpack.c.l.b16 %v128
    %v721 = vunpack.c.h.b16 %v128
    %v722 = vunpack.c.l.b16 %v129
    %v723 = vunpack.c.h.b16 %v129
    %v724 = vunpack.c.l.b16 %v130
    %v725 = vunpack.c.h.b16 %v130
    %v726 = vunpack.c.l.b16 %v131
    %v727 = vunpack.c.h.b16 %v131
    %v728 = vunpack.c.l.b16 %v132
    %v729 = vunpack.c.h.b16 %v132
    %v730 = vunpack.c.l.b16 %v133
    %v731 = vunpack.c.h.b16 %v133
    %v732 = vunpack.c.l.b16 %v134
    %v733 = vunpack.c.h.b16 %v134
    %v734 = vunpack.c.l.b16 %v135
    %v735 = vunpack.c.h.b16 %v135
    %v736 = vunpack.c.l.b16 %v136
    %v737 = vunpack.c.h.b16 %v136
    %v738 = vunpack.c.l.b16 %v137
    %v739 = vunpack.c.h.b16 %v137
    %v740 = vunpack.c.l.b16 %v138
    %v741 = vunpack.c.h.b16 %v138
    %v742 = vunpack.c.l.b16 %v139
    %v743 = vunpack.c.h.b16 %v139
    %v744 = vunpack.c.l.b16 %v140
    %v745 = vunpack.c.h.b16 %v140
    %v746 = vunpack.c.l.b16 %v141
    %v747 = vunpack.c.h.b16 %v141
    %v748 = vunpack.c.l.b16 %v142
    %v749 = vunpack.c.h.b16 %v142
    %v750 = vunpack.c.l.b16 %v143
    %v751 = vunpack.c.h.b16 %v143
    %v752 = vunpack.c.l.b16 %v144
    %v753 = vunpack.c.h.b16 %v144
    %v754 = vunpack.c.l.b16 %v145
    %v755 = vunpack.c.h.b16 %v145
    %v756 = vunpack.c.l.b16 %v146
    %v757 = vunpack.c.h.b16 %v146
    %v758 = vunpack.c.l.b16 %v147
    %v759 = vunpack.c.h.b16 %v147
    %v760 = vunpack.c.l.b16 %v148
    %v761 = vunpack.c.h.b16 %v148
    %v762 = vunpack.c.l.b16 %v149
    %v763 = vunpack.c.h.b16 %v149
    %v764 = vunpack.c.l.b16 %v150
    %v765 = vunpack.c.h.b16 %v150
    %v766 = vunpack.c.l.b16 %v151
    %v767 = vunpack.c.h.b16 %v151
    %v768 = vunpack.c.l.b16 %v152
    %v769 = vunpack.c.h.b16 %v152
    %v770 = vunpack.c.l.b16 %v153
    %v771 = vunpack.c.h.b16 %v153
    %v772 = vunpack.c.l.b16 %v154
    %v773 = vunpack.c.h.b16 %v154
    %v774 = vunpack.c.l.b16 %v155
    %v775 = vunpack.c.h.b16 %v155
    %v776 = vunpack.c.l.b16 %v156
    %v777 = vunpack.c.h.b16 %v156
    %v778 = vunpack.c.l.b16 %v157
    %v779 = vunpack.c.h.b16 %v157
    %v780 = vunpack.c.l.b16 %v158
    %v781 = vunpack.c.h.b16 %v158
    %v782 = vunpack.c.l.b16 %v159
    %v783 = vunpack.c.h.b16 %v159
    %v784 = vunpack.c.l.b16 %v160
    %v785 = vunpack.c.h.b16 %v160
    %v786 = vunpack.c.l.b16 %v161
    %v787 = vunpack.c.h.b16 %v161
    %v788 = vunpack.c.l.b16 %v162
    %v789 = vunpack.c.h.b16 %v162
    %v790 = vunpack.c.l.b16 %v163
    %v791 = vunpack.c.h.b16 %v163
    %v792 = vunpack.c.l.b16 %v164
    %v793 = vunpack.c.h.b16 %v164
    %v794 = vunpack.c.l.b16 %v165
    %v795 = vunpack.c.h.b16 %v165
    %v796 = vunpack.c.l.b16 %v166
    %v797 = vunpack.c.h.b16 %v166
    %v798 = vunpack.c.l.b16 %v167
    %v799 = vunpack.c.h.b16 %v167
    %v800 = vunpack.c.l.b16 %v168
    %v801 = vunpack.c.h.b16 %v168
    %v802 = vunpack.c.l.b16 %v169
    %v803 = vunpack.c.h.b16 %v169
    %v804 = vunpack.c.l.b16 %v170
    %v805 = vunpack.c.h.b16 %v170
    %v806 = vunpack.c.l.b16 %v171
    %v807 = vunpack.c.h.b16 %v171
    %v808 = vunpack.c.l.b16 %v172
    %v809 = vunpack.c.h.b16 %v172
    %v810 = vunpack.c.l.b16 %v173
    %v811 = vunpack.c.h.b16 %v173
    %v812 = vunpack.c.l.b16 %v174
    %v813 = vunpack.c.h.b16 %v174
    %v814 = vunpack.c.l.b16 %v175
    %v815 = vunpack.c.h.b16 %v175
    %v816 = vunpack.c.l.b16 %v176
    %v817 = vunpack.c.h.b16 %v176
    %v818 = vunpack.c.l.b16 %v177
    %v819 = vunpack.c.h.b16 %v177
    %v820 = vunpack.c.l.b16 %v178
    %v821 = vunpack.c.h.b16 %v178
    %v822 = vunpack.c.l.b16 %v179
    %v823 = vunpack.c.h.b16 %v179
    %v824 = vunpack.c.l.b16 %v180
    %v825 = vunpack.c.h.b16 %v180
    %v826 = vunpack.c.l.b16 %v181
    %v827 = vunpack.c.h.b16 %v181
    %v828 = vunpack.c.l.b16 %v182
    %v829 = vunpack.c.h.b16 %v182
    %v830 = vunpack.c.l.b16 %v183
    %v831 = vunpack.c.h.b16 %v183
    %v832 = vunpack.c.l.b16 %v184
    %v833 = vunpack.c.h.b16 %v184
    %v834 = vunpack.c.l.b16 %v185
    %v835 = vunpack.c.h.b16 %v185
    %v836 = vunpack.c.l.b16 %v186
    %v837 = vunpack.c.h.b16 %v186
    %v838 = vunpack.c.l.b16 %v187
    %v839 = vunpack.c.h.b16 %v187
    %v840 = vunpack.c.l.b16 %v188
    %v841 = vunpack.c.h.b16 %v188
    %v842 = vunpack.c.l.b16 %v189
    %v843 = vunpack.c.h.b16 %v189
    %v844 = vunpack.c.l.b16 %v190
    %v845 = vunpack.c.h.b16 %v190
    %v846 = vunpack.c.l.b16 %v191
    %v847 = vunpack.c.h.b16 %v191
    %v848 = vunpack.c.l.b16 %v192
    %v849 = vunpack.c.h.b16 %v192
    %v850 = vunpack.c.l.b16 %v193
    %v851 = vunpack.c.h.b16 %v193
    %v852 = vunpack.c.l.b16 %v194
    %v853 = vunpack.c.h.b16 %v194
    %v854 = vunpack.c.l.b16 %v195
    %v855 = vunpack.c.h.b16 %v195
    %v856 = vunpack.c.l.b16 %v196
    %v857 = vunpack.c.h.b16 %v196
    %v858 = vunpack.c.l.b16 %v197
    %v859 = vunpack.c.h.b16 %v197
    %v860 = vunpack.c.l.b16 %v198
    %v861 = vunpack.c.h.b16 %v198
    %v862 = vunpack.c.l.b16 %v199
    %v863 = vunpack.c.h.b16 %v199
    %v864 = vunpack.c.l.b16 %v200
    %v865 = vunpack.c.h.b16 %v200
    %v866 = vunpack.c.l.b16 %v201
    %v867 = vunpack.c.h.b16 %v201
    %v868 = vunpack.c.l.b16 %v202
    %v869 = vunpack.c.h.b16 %v202
    %v870 = vunpack.c.l.b16 %v203
    %v871 = vunpack.c.h.b16 %v203
    %v872 = vunpack.c.l.b16 %v204
    %v873 = vunpack.c.h.b16 %v204
    %v874 = vunpack.c.l.b16 %v205
    %v875 = vunpack.c.h.b16 %v205
    %v876 = vunpack.c.l.b16 %v206
    %v877 = vunpack.c.h.b16 %v206
    %v878 = vunpack.c.l.b16 %v207
    %v879 = vunpack.c.h.b16 %v207
    %v880 = vunpack.c.l.b16 %v208
    %v881 = vunpack.c.h.b16 %v208
    %v882 = vunpack.c.l.b16 %v209
    %v883 = vunpack.c.h.b16 %v209
    %v884 = vunpack.c.l.b16 %v210
    %v885 = vunpack.c.h.b16 %v210
    %v886 = vunpack.c.l.b16 %v211
    %v887 = vunpack.c.h.b16 %v211
    %v888 = vunpack.c.l.b16 %v212
    %v889 = vunpack.c.h.b16 %v212
    %v890 = vunpack.c.l.b16 %v213
    %v891 = vunpack.c.h.b16 %v213
    %v892 = vunpack.c.l.b16 %v214
    %v893 = vunpack.c.h.b16 %v214
    %v894 = vunpack.c.l.b16 %v215
    %v895 = vunpack.c.h.b16 %v215
    %v896 = vunpack.c.l.b16 %v216
    %v897 = vunpack.c.h.b16 %v216
    %v898 = vunpack.c.l.b16 %v217
    %v899 = vunpack.c.h.b16 %v217
    %v900 = vunpack.c.l.b16 %v218
    %v901 = vunpack.c.h.b16 %v218
    %v902 = vunpack.c.l.b16 %v219
    %v903 = vunpack.c.h.b16 %v219
    %v904 = vunpack.c.l.b16 %v220
    %v905 = vunpack.c.h.b16 %v220
    %v906 = vunpack.c.l.b16 %v221
    %v907 = vunpack.c.h.b16 %v221
    %v908 = vunpack.c.l.b16 %v222
    %v909 = vunpack.c.h.b16 %v222
    %v910 = vunpack.c.l.b16 %v223
    %v911 = vunpack.c.h.b16 %v223
    %v912 = vunpack.c.l.b16 %v224
    %v913 = vunpack.c.h.b16 %v224
    %v914 = vunpack.c.l.b16 %v225
    %v915 = vunpack.c.h.b16 %v225
    %v916 = vunpack.c.l.b16 %v226
    %v917 = vunpack.c.h.b16 %v226
    %v918 = vunpack.c.l.b16 %v227
    %v919 = vunpack.c.h.b16 %v227
    %v920 = vunpack.c.l.b16 %v228
    %v921 = vunpack.c.h.b16 %v228
    %v922 = vunpack.c.l.b16 %v229
    %v923 = vunpack.c.h.b16 %v229
    %v924 = vunpack.c.l.b16 %v230
    %v925 = vunpack.c.h.b16 %v230
    %v926 = vunpack.c.l.b16 %v231
    %v927 = vunpack.c.h.b16 %v231
    %v928 = vunpack.c.l.b16 %v232
    %v929 = vunpack.c.h.b16 %v232
    %v930 = vunpack.c.l.b16 %v233
    %v931 = vunpack.c.h.b16 %v233
    %v932 = vunpack.c.l.b16 %v234
    %v933 = vunpack.c.h.b16 %v234
    %v934 = vunpack.c.l.b16 %v235
    %v935 = vunpack.c.h.b16 %v235
    %v936 = vunpack.c.l.b16 %v236
    %v937 = vunpack.c.h.b16 %v236
    %v938 = vunpack.c.l.b16 %v237
    %v939 = vunpack.c.h.b16 %v237
    %v940 = vunpack.c.l.b16 %v238
    %v941 = vunpack.c.h.b16 %v238
    %v942 = vunpack.c.l.b16 %v239
    %v943 = vunpack.c.h.b16 %v239
    %v944 = vunpack.c.l.b16 %v240
    %v945 = vunpack.c.h.b16 %v240
    %v946 = vunpack.c.l.b16 %v241
    %v947 = vunpack.c.h.b16 %v241
    %v948 = vunpack.c.l.b16 %v242
    %v949 = vunpack.c.h.b16 %v242
    %v950 = vunpack.c.l.b16 %v243
    %v951 = vunpack.c.h.b16 %v243
    %v952 = vunpack.c.l.b16 %v244
    %v953 = vunpack.c.h.b16 %v244
    %v954 = vunpack.c.l.b16 %v245
    %v955 = vunpack.c.h.b16 %v245
    %v956 = vunpack.c.l.b16 %v246
    %v957 = vunpack.c.h.b16 %v246
    %v958 = vunpack.c.l.b16 %v247
    %v959 = vunpack.c.h.b16 %v247
    %v960 = vunpack.c.l.b16 %v248
    %v961 = vunpack.c.h.b16 %v248
    %v962 = vunpack.c.l.b16 %v249
    %v963 = vunpack.c.h.b16 %v249
    %v964 = vunpack.c.l.b16 %v250
    %v965 = vunpack.c.h.b16 %v250
    %v966 = vunpack.c.l.b16 %v251
    %v967 = vunpack.c.h.b16 %v251
    %v968 = vunpack.c.l.b16 %v252
    %v969 = vunpack.c.h.b16 %v252
    %v970 = vunpack.c.l.b16 %v253
    %v971 = vunpack.c.h.b16 %v253
    %v972 = vunpack.c.l.b16 %v254
    %v973 = vunpack.c.h.b16 %v254
    %v974 = vunpack.c.l.b16 %v255
    %v975 = vunpack.c.h.b16 %v255
    %v976 = vunpack.c.l.b16 %v256
    %v977 = vunpack.c.h.b16 %v256
    %v978 = vunpack.c.l.b16 %v257
    %v979 = vunpack.c.h.b16 %v257
    %v980 = vunpack.c.l.b16 %v258
    %v981 = vunpack.c.h.b16 %v258
    %v982 = vunpack.c.l.b16 %v259
    %v983 = vunpack.c.h.b16 %v259
    %v984 = vunpack.c.l.b16 %v260
    %v985 = vunpack.c.h.b16 %v260
    %v986 = vunpack.c.l.b16 %v261
    %v987 = vunpack.c.h.b16 %v261
    %v988 = vunpack.c.l.b16 %v262
    %v989 = vunpack.c.h.b16 %v262
    %v990 = vunpack.c.l.b16 %v263
    %v991 = vunpack.c.h.b16 %v263
    %v992 = vunpack.c.l.b16 %v264
    %v993 = vunpack.c.h.b16 %v264
    %v994 = vunpack.c.l.b16 %v265
    %v995 = vunpack.c.h.b16 %v265
    %v996 = vunpack.c.l.b16 %v266
    %v997 = vunpack.c.h.b16 %v266
    %v998 = vunpack.c.l.b16 %v267
    %v999 = vunpack.c.h.b16 %v267
    %v1000 = vunpack.c.l.b16 %v268
    %v1001 = vunpack.c.h.b16 %v268
    %v1002 = vunpack.c.l.b16 %v269
    %v1003 = vunpack.c.h.b16 %v269
    %v1004 = vunpack.c.l.b16 %v270
    %v1005 = vunpack.c.h.b16 %v270
    %v1006 = vunpack.c.l.b16 %v271
    %v1007 = vunpack.c.h.b16 %v271
    %v1008 = vunpack.c.l.b16 %v272
    %v1009 = vunpack.c.h.b16 %v272
    %v1010 = vunpack.c.l.b16 %v273
    %v1011 = vunpack.c.h.b16 %v273
    %v1012 = vunpack.c.l.b16 %v274
    %v1013 = vunpack.c.h.b16 %v274
    %v1014 = vunpack.c.l.b16 %v275
    %v1015 = vunpack.c.h.b16 %v275
    %v1016 = vunpack.c.l.b16 %v276
    %v1017 = vunpack.c.h.b16 %v276
    %v1018 = vunpack.c.l.b16 %v277
    %v1019 = vunpack.c.h.b16 %v277
    %v1020 = vunpack.c.l.b16 %v278
    %v1021 = vunpack.c.h.b16 %v278
    %v1022 = vunpack.c.l.b16 %v279
    %v1023 = vunpack.c.h.b16 %v279
    %v1024 = vunpack.c.l.b16 %v280
    %v1025 = vunpack.c.h.b16 %v280
    %v1026 = vunpack.c.l.b16 %v281
    %v1027 = vunpack.c.h.b16 %v281
    %v1028 = vunpack.c.l.b16 %v282
    %v1029 = vunpack.c.h.b16 %v282
    %v1030 = vunpack.c.l.b16 %v283
    %v1031 = vunpack.c.h.b16 %v283
    %v1032 = vunpack.c.l.b16 %v284
    %v1033 = vunpack.c.h.b16 %v284
    %v1034 = vunpack.c.l.b16 %v285
    %v1035 = vunpack.c.h.b16 %v285
    %v1036 = vunpack.c.l.b16 %v286
    %v1037 = vunpack.c.h.b16 %v286
    %v1038 = vunpack.c.l.b16 %v287
    %v1039 = vunpack.c.h.b16 %v287
    %v1040 = vunpack.c.l.b16 %v288
    %v1041 = vunpack.c.h.b16 %v288
    %v1042 = vunpack.c.l.b16 %v289
    %v1043 = vunpack.c.h.b16 %v289
    %v1044 = vunpack.c.l.b16 %v290
    %v1045 = vunpack.c.h.b16 %v290
    %v1046 = vunpack.c.l.b16 %v291
    %v1047 = vunpack.c.h.b16 %v291
    %v1048 = vunpack.c.l.b16 %v292
    %v1049 = vunpack.c.h.b16 %v292
    %v1050 = vunpack.c.l.b16 %v293
    %v1051 = vunpack.c.h.b16 %v293
    %v1052 = vunpack.c.l.b16 %v294
    %v1053 = vunpack.c.h.b16 %v294
    %v1054 = vunpack.c.l.b16 %v295
    %v1055 = vunpack.c.h.b16 %v295
    %v1056 = vunpack.c.l.b16 %v296
    %v1057 = vunpack.c.h.b16 %v296
    %v1058 = vunpack.c.l.b16 %v297
    %v1059 = vunpack.c.h.b16 %v297
    %v1060 = vunpack.c.l.b16 %v298
    %v1061 = vunpack.c.h.b16 %v298
    %v1062 = vunpack.c.l.b16 %v299
    %v1063 = vunpack.c.h.b16 %v299
    %v1064 = vunpack.c.l.b16 %v300
    %v1065 = vunpack.c.h.b16 %v300
    %v1066 = vunpack.c.l.b16 %v301
    %v1067 = vunpack.c.h.b16 %v301
    %v1068 = vunpack.c.l.b16 %v302
    %v1069 = vunpack.c.h.b16 %v302
    %v1070 = vunpack.c.l.b16 %v303
    %v1071 = vunpack.c.h.b16 %v303
    %v1072 = vunpack.c.l.b16 %v304
    %v1073 = vunpack.c.h.b16 %v304
    %v1074 = vunpack.c.l.b16 %v305
    %v1075 = vunpack.c.h.b16 %v305
    %v1076 = vunpack.c.l.b16 %v306
    %v1077 = vunpack.c.h.b16 %v306
    %v1078 = vunpack.c.l.b16 %v307
    %v1079 = vunpack.c.h.b16 %v307
    %v1080 = vunpack.c.l.b16 %v308
    %v1081 = vunpack.c.h.b16 %v308
    %v1082 = vunpack.c.l.b16 %v309
    %v1083 = vunpack.c.h.b16 %v309
    %v1084 = vunpack.c.l.b16 %v310
    %v1085 = vunpack.c.h.b16 %v310
    %v1086 = vunpack.c.l.b16 %v311
    %v1087 = vunpack.c.h.b16 %v311
    %v1088 = vunpack.c.l.b16 %v312
    %v1089 = vunpack.c.h.b16 %v312
    %v1090 = vunpack.c.l.b16 %v313
    %v1091 = vunpack.c.h.b16 %v313
    %v1092 = vunpack.c.l.b16 %v314
    %v1093 = vunpack.c.h.b16 %v314
    %v1094 = vunpack.c.l.b16 %v315
    %v1095 = vunpack.c.h.b16 %v315
    %v1096 = vunpack.c.l.b16 %v316
    %v1097 = vunpack.c.h.b16 %v316
    %v1098 = vunpack.c.l.b16 %v317
    %v1099 = vunpack.c.h.b16 %v317
    %v1100 = vunpack.c.l.b16 %v318
    %v1101 = vunpack.c.h.b16 %v318
    %v1102 = vunpack.c.l.b16 %v319
    %v1103 = vunpack.c.h.b16 %v319
    %v1104 = vunpack.c.l.b16 %v320
    %v1105 = vunpack.c.h.b16 %v320
    %v1106 = vunpack.c.l.b16 %v321
    %v1107 = vunpack.c.h.b16 %v321
    %v1108 = vunpack.c.l.b16 %v322
    %v1109 = vunpack.c.h.b16 %v322
    %v1110 = vunpack.c.l.b16 %v323
    %v1111 = vunpack.c.h.b16 %v323
    %v1112 = vunpack.c.l.b16 %v324
    %v1113 = vunpack.c.h.b16 %v324
    %v1114 = vunpack.c.l.b16 %v325
    %v1115 = vunpack.c.h.b16 %v325
    %v1116 = vunpack.c.l.b16 %v326
    %v1117 = vunpack.c.h.b16 %v326
    %v1118 = vunpack.c.l.b16 %v327
    %v1119 = vunpack.c.h.b16 %v327
    %v1120 = vunpack.c.l.b16 %v328
    %v1121 = vunpack.c.h.b16 %v328
    %v1122 = vunpack.c.l.b16 %v329
    %v1123 = vunpack.c.h.b16 %v329
    %v1124 = vunpack.c.l.b16 %v330
    %v1125 = vunpack.c.h.b16 %v330
    %v1126 = vunpack.c.l.b16 %v331
    %v1127 = vunpack.c.h.b16 %v331
    %v1128 = vunpack.c.l.b16 %v332
    %v1129 = vunpack.c.h.b16 %v332
    %v1130 = vunpack.c.l.b16 %v333
    %v1131 = vunpack.c.h.b16 %v333
    %v1132 = vunpack.c.l.b16 %v334
    %v1133 = vunpack.c.h.b16 %v334
    %v1134 = vunpack.c.l.b16 %v335
    %v1135 = vunpack.c.h.b16 %v335
    %v1136 = vunpack.c.l.b16 %v336
    %v1137 = vunpack.c.h.b16 %v336
    %v1138 = vunpack.c.l.b16 %v337
    %v1139 = vunpack.c.h.b16 %v337
    %v1140 = vunpack.c.l.b16 %v338
    %v1141 = vunpack.c.h.b16 %v338
    %v1142 = vunpack.c.l.b16 %v339
    %v1143 = vunpack.c.h.b16 %v339
    %v1144 = vunpack.c.l.b16 %v340
    %v1145 = vunpack.c.h.b16 %v340
    %v1146 = vunpack.c.l.b16 %v341
    %v1147 = vunpack.c.h.b16 %v341
    %v1148 = vunpack.c.l.b16 %v342
    %v1149 = vunpack.c.h.b16 %v342
    %v1150 = vunpack.c.l.b16 %v343
    %v1151 = vunpack.c.h.b16 %v343
    %v1152 = vunpack.c.l.b16 %v344
    %v1153 = vunpack.c.h.b16 %v344
    %v1154 = vunpack.c.l.b16 %v345
    %v1155 = vunpack.c.h.b16 %v345
    %v1156 = vunpack.c.l.b16 %v346
    %v1157 = vunpack.c.h.b16 %v346
    %v1158 = vunpack.c.l.b16 %v347
    %v1159 = vunpack.c.h.b16 %v347
    %v1160 = vunpack.c.l.b16 %v348
    %v1161 = vunpack.c.h.b16 %v348
    %v1162 = vunpack.c.l.b16 %v349
    %v1163 = vunpack.c.h.b16 %v349
    %v1164 = vunpack.c.l.b16 %v350
    %v1165 = vunpack.c.h.b16 %v350
    %v1166 = vunpack.c.l.b16 %v351
    %v1167 = vunpack.c.h.b16 %v351
    %v1168 = vunpack.c.l.b16 %v352
    %v1169 = vunpack.c.h.b16 %v352
    %v1170 = vunpack.c.l.b16 %v353
    %v1171 = vunpack.c.h.b16 %v353
    %v1172 = vunpack.c.l.b16 %v354
    %v1173 = vunpack.c.h.b16 %v354
    %v1174 = vunpack.c.l.b16 %v355
    %v1175 = vunpack.c.h.b16 %v355
    %v1176 = vunpack.c.l.b16 %v356
    %v1177 = vunpack.c.h.b16 %v356
    %v1178 = vunpack.c.l.b16 %v357
    %v1179 = vunpack.c.h.b16 %v357
    %v1180 = vunpack.c.l.b16 %v358
    %v1181 = vunpack.c.h.b16 %v358
    %v1182 = vunpack.c.l.b16 %v359
    %v1183 = vunpack.c.h.b16 %v359
    %v1184 = vunpack.c.l.b16 %v360
    %v1185 = vunpack.c.h.b16 %v360
    %v1186 = vunpack.c.l.b16 %v361
    %v1187 = vunpack.c.h.b16 %v361
    %v1188 = vunpack.c.l.b16 %v362
    %v1189 = vunpack.c.h.b16 %v362
    %v1190 = vunpack.c.l.b16 %v363
    %v1191 = vunpack.c.h.b16 %v363
    %v1192 = vunpack.c.l.b16 %v364
    %v1193 = vunpack.c.h.b16 %v364
    %v1194 = vunpack.c.l.b16 %v365
    %v1195 = vunpack.c.h.b16 %v365
    %v1196 = vpack.c.b16 %v688, %v684
    %v1197 = vpack.c.b16 %v689, %v685
    %v1198 = vpack.c.b16 %v690, %v686
    %v1199 = vpack.c.b16 %v691, %v687
    %v1200 = vpack.c.b16 %v696, %v692
    %v1201 = vpack.c.b16 %v697, %v693
    %v1202 = vpack.c.b16 %v698, %v694
    %v1203 = vpack.c.b16 %v699, %v695
    %v1204 = vpack.c.b16 %v704, %v700
    %v1205 = vpack.c.b16 %v705, %v701
    %v1206 = vpack.c.b16 %v706, %v702
    %v1207 = vpack.c.b16 %v707, %v703
    %v1208 = vpack.c.b16 %v712, %v708
    %v1209 = vpack.c.b16 %v713, %v709
    %v1210 = vpack.c.b16 %v714, %v710
    %v1211 = vpack.c.b16 %v715, %v711
    %v1212 = vpack.c.b16 %v720, %v716
    %v1213 = vpack.c.b16 %v721, %v717
    %v1214 = vpack.c.b16 %v722, %v718
    %v1215 = vpack.c.b16 %v723, %v719
    %v1216 = vpack.c.b16 %v728, %v724
    %v1217 = vpack.c.b16 %v729, %v725
    %v1218 = vpack.c.b16 %v730, %v726
    %v1219 = vpack.c.b16 %v731, %v727
    %v1220 = vpack.c.b16 %v736, %v732
    %v1221 = vpack.c.b16 %v737, %v733
    %v1222 = vpack.c.b16 %v738, %v734
    %v1223 = vpack.c.b16 %v739, %v735
    %v1224 = vpack.c.b16 %v744, %v740
    %v1225 = vpack.c.b16 %v745, %v741
    %v1226 = vpack.c.b16 %v746, %v742
    %v1227 = vpack.c.b16 %v747, %v743
    %v1228 = vpack.c.b16 %v752, %v748
    %v1229 = vpack.c.b16 %v753, %v749
    %v1230 = vpack.c.b16 %v754, %v750
    %v1231 = vpack.c.b16 %v755, %v751
    %v1232 = vpack.c.b16 %v760, %v756
    %v1233 = vpack.c.b16 %v761, %v757
    %v1234 = vpack.c.b16 %v762, %v758
    %v1235 = vpack.c.b16 %v763, %v759
    %v1236 = vpack.c.b16 %v768, %v764
    %v1237 = vpack.c.b16 %v769, %v765
    %v1238 = vpack.c.b16 %v770, %v766
    %v1239 = vpack.c.b16 %v771, %v767
    %v1240 = vpack.c.b16 %v776, %v772
    %v1241 = vpack.c.b16 %v777, %v773
    %v1242 = vpack.c.b16 %v778, %v774
    %v1243 = vpack.c.b16 %v779, %v775
    %v1244 = vpack.c.b16 %v784, %v780
    %v1245 = vpack.c.b16 %v785, %v781
    %v1246 = vpack.c.b16 %v786, %v782
    %v1247 = vpack.c.b16 %v787, %v783
    %v1248 = vpack.c.b16 %v792, %v788
    %v1249 = vpack.c.b16 %v793, %v789
    %v1250 = vpack.c.b16 %v794, %v790
    %v1251 = vpack.c.b16 %v795, %v791
    %v1252 = vpack.c.b16 %v800, %v796
    %v1253 = vpack.c.b16 %v801, %v797
    %v1254 = vpack.c.b16 %v802, %v798
    %v1255 = vpack.c.b16 %v803, %v799
    %v1256 = vpack.c.b16 %v808, %v804
    %v1257 = vpack.c.b16 %v809, %v805
    %v1258 = vpack.c.b16 %v810, %v806
    %v1259 = vpack.c.b16 %v811, %v807
    %v1260 = vpack.c.b16 %v816, %v812
    %v1261 = vpack.c.b16 %v817, %v813
    %v1262 = vpack.c.b16 %v818, %v814
    %v1263 = vpack.c.b16 %v819, %v815
    %v1264 = vpack.c.b16 %v824, %v820
    %v1265 = vpack.c.b16 %v825, %v821
    %v1266 = vpack.c.b16 %v826, %v822
    %v1267 = vpack.c.b16 %v827, %v823
    %v1268 = vpack.c.b16 %v832, %v828
    %v1269 = vpack.c.b16 %v833, %v829
    %v1270 = vpack.c.b16 %v834, %v830
    %v1271 = vpack.c.b16 %v835, %v831
    %v1272 = vpack.c.b16 %v840, %v836
    %v1273 = vpack.c.b16 %v841, %v837
    %v1274 = vpack.c.b16 %v842, %v838
    %v1275 = vpack.c.b16 %v843, %v839
    %v1276 = vpack.c.b16 %v848, %v844
    %v1277 = vpack.c.b16 %v849, %v845
    %v1278 = vpack.c.b16 %v850, %v846
    %v1279 = vpack.c.b16 %v851, %v847
    %v1280 = vpack.c.b16 %v856, %v852
    %v1281 = vpack.c.b16 %v857, %v853
    %v1282 = vpack.c.b16 %v858, %v854
    %v1283 = vpack.c.b16 %v859, %v855
    %v1284 = vpack.c.b16 %v864, %v860
    %v1285 = vpack.c.b16 %v865, %v861
    %v1286 = vpack.c.b16 %v866, %v862
    %v1287 = vpack.c.b16 %v867, %v863
    %v1288 = vpack.c.b16 %v872, %v868
    %v1289 = vpack.c.b16 %v873, %v869
    %v1290 = vpack.c.b16 %v874, %v870
    %v1291 = vpack.c.b16 %v875, %v871
    %v1292 = vpack.c.b16 %v880, %v876
    %v1293 = vpack.c.b16 %v881, %v877
    %v1294 = vpack.c.b16 %v882, %v878
    %v1295 = vpack.c.b16 %v883, %v879
    %v1296 = vpack.c.b16 %v888, %v884
    %v1297 = vpack.c.b16 %v889, %v885
    %v1298 = vpack.c.b16 %v890, %v886
    %v1299 = vpack.c.b16 %v891, %v887
    %v1300 = vpack.c.b16 %v896, %v892
    %v1301 = vpack.c.b16 %v897, %v893
    %v1302 = vpack.c.b16 %v898, %v894
    %v1303 = vpack.c.b16 %v899, %v895
    %v1304 = vpack.c.b16 %v904, %v900
    %v1305 = vpack.c.b16 %v905, %v901
    %v1306 = vpack.c.b16 %v906, %v902
    %v1307 = vpack.c.b16 %v907, %v903
    %v1308 = vpack.c.b16 %v912, %v908
    %v1309 = vpack.c.b16 %v913, %v909
    %v1310 = vpack.c.b16 %v914, %v910
    %v1311 = vpack.c.b16 %v915, %v911
    %v1312 = vpack.c.b16 %v920, %v916
    %v1313 = vpack.c.b16 %v921, %v917
    %v1314 = vpack.c.b16 %v922, %v918
    %v1315 = vpack.c.b16 %v923, %v919
    %v1316 = vpack.c.b16 %v928, %v924
    %v1317 = vpack.c.b16 %v929, %v925
    %v1318 = vpack.c.b16 %v930, %v926
    %v1319 = vpack.c.b16 %v931, %v927
    %v1320 = vpack.c.b16 %v936, %v932
    %v1321 = vpack.c.b16 %v937, %v933
    %v1322 = vpack.c.b16 %v938, %v934
    %v1323 = vpack.c.b16 %v939, %v935
    %v1324 = vpack.c.b16 %v944, %v940
    %v1325 = vpack.c.b16 %v945, %v941
    %v1326 = vpack.c.b16 %v946, %v942
    %v1327 = vpack.c.b16 %v947, %v943
    %v1328 = vpack.c.b16 %v952, %v948
    %v1329 = vpack.c.b16 %v953, %v949
    %v1330 = vpack.c.b16 %v954, %v950
    %v1331 = vpack.c.b16 %v955, %v951
    %v1332 = vpack.c.b16 %v960, %v956
    %v1333 = vpack.c.b16 %v961, %v957
    %v1334 = vpack.c.b16 %v962, %v958
    %v1335 = vpack.c.b16 %v963, %v959
    %v1336 = vpack.c.b16 %v968, %v964
    %v1337 = vpack.c.b16 %v969, %v965
    %v1338 = vpack.c.b16 %v970, %v966
    %v1339 = vpack.c.b16 %v971, %v967
    %v1340 = vpack.c.b16 %v976, %v972
    %v1341 = vpack.c.b16 %v977, %v973
    %v1342 = vpack.c.b16 %v978, %v974
    %v1343 = vpack.c.b16 %v979, %v975
    %v1344 = vpack.c.b16 %v984, %v980
    %v1345 = vpack.c.b16 %v985, %v981
    %v1346 = vpack.c.b16 %v986, %v982
    %v1347 = vpack.c.b16 %v987, %v983
    %v1348 = vpack.c.b16 %v992, %v988
    %v1349 = vpack.c.b16 %v993, %v989
    %v1350 = vpack.c.b16 %v994, %v990
    %v1351 = vpack.c.b16 %v995, %v991
    %v1352 = vpack.c.b16 %v1000, %v996
    %v1353 = vpack.c.b16 %v1001, %v997
    %v1354 = vpack.c.b16 %v1002, %v998
    %v1355 = vpack.c.b16 %v1003, %v999
    %v1356 = vpack.c.b16 %v1008, %v1004
    %v1357 = vpack.c.b16 %v1009, %v1005
    %v1358 = vpack.c.b16 %v1010, %v1006
    %v1359 = vpack.c.b16 %v1011, %v1007
    %v1360 = vpack.c.b16 %v1016, %v1012
    %v1361 = vpack.c.b16 %v1017, %v1013
    %v1362 = vpack.c.b16 %v1018, %v1014
    %v1363 = vpack.c.b16 %v1019, %v1015
    %v1364 = vpack.c.b16 %v1024, %v1020
    %v1365 = vpack.c.b16 %v1025, %v1021
    %v1366 = vpack.c.b16 %v1026, %v1022
    %v1367 = vpack.c.b16 %v1027, %v1023
    %v1368 = vpack.c.b16 %v1032, %v1028
    %v1369 = vpack.c.b16 %v1033, %v1029
    %v1370 = vpack.c.b16 %v1034, %v1030
    %v1371 = vpack.c.b16 %v1035, %v1031
    %v1372 = vpack.c.b16 %v1040, %v1036
    %v1373 = vpack.c.b16 %v1041, %v1037
    %v1374 = vpack.c.b16 %v1042, %v1038
    %v1375 = vpack.c.b16 %v1043, %v1039
    %v1376 = vpack.c.b16 %v1048, %v1044
    %v1377 = vpack.c.b16 %v1049, %v1045
    %v1378 = vpack.c.b16 %v1050, %v1046
    %v1379 = vpack.c.b16 %v1051, %v1047
    %v1380 = vpack.c.b16 %v1056, %v1052
    %v1381 = vpack.c.b16 %v1057, %v1053
    %v1382 = vpack.c.b16 %v1058, %v1054
    %v1383 = vpack.c.b16 %v1059, %v1055
    %v1384 = vpack.c.b16 %v1064, %v1060
    %v1385 = vpack.c.b16 %v1065, %v1061
    %v1386 = vpack.c.b16 %v1066, %v1062
    %v1387 = vpack.c.b16 %v1067, %v1063
    %v1388 = vpack.c.b16 %v1072, %v1068
    %v1389 = vpack.c.b16 %v1073, %v1069
    %v1390 = vpack.c.b16 %v1074, %v1070
    %v1391 = vpack.c.b16 %v1075, %v1071
    %v1392 = vpack.c.b16 %v1080, %v1076
    %v1393 = vpack.c.b16 %v1081, %v1077
    %v1394 = vpack.c.b16 %v1082, %v1078
    %v1395 = vpack.c.b16 %v1083, %v1079
    %v1396 = vpack.c.b16 %v1088, %v1084
    %v1397 = vpack.c.b16 %v1089, %v1085
    %v1398 = vpack.c.b16 %v1090, %v1086
    %v1399 = vpack.c.b16 %v1091, %v1087
    %v1400 = vpack.c.b16 %v1096, %v1092
    %v1401 = vpack.c.b16 %v1097, %v1093
    %v1402 = vpack.c.b16 %v1098, %v1094
    %v1403 = vpack.c.b16 %v1099, %v1095
    %v1404 = vpack.c.b16 %v1104, %v1100
    %v1405 = vpack.c.b16 %v1105, %v1101
    %v1406 = vpack.c.b16 %v1106, %v1102
    %v1407 = vpack.c.b16 %v1107, %v1103
    %v1408 = vpack.c.b16 %v1112, %v1108
    %v1409 = vpack.c.b16 %v1113, %v1109
    %v1410 = vpack.c.b16 %v1114, %v1110
    %v1411 = vpack.c.b16 %v1115, %v1111
    %v1412 = vpack.c.b16 %v1120, %v1116
    %v1413 = vpack.c.b16 %v1121, %v1117
    %v1414 = vpack.c.b16 %v1122, %v1118
    %v1415 = vpack.c.b16 %v1123, %v1119
    %v1416 = vpack.c.b16 %v1128, %v1124
    %v1417 = vpack.c.b16 %v1129, %v1125
    %v1418 = vpack.c.b16 %v1130, %v1126
    %v1419 = vpack.c.b16 %v1131, %v1127
    %v1420 = vpack.c.b16 %v1136, %v1132
    %v1421 = vpack.c.b16 %v1137, %v1133
    %v1422 = vpack.c.b16 %v1138, %v1134
    %v1423 = vpack.c.b16 %v1139, %v1135
    %v1424 = vpack.c.b16 %v1144, %v1140
    %v1425 = vpack.c.b16 %v1145, %v1141
    %v1426 = vpack.c.b16 %v1146, %v1142
    %v1427 = vpack.c.b16 %v1147, %v1143
    %v1428 = vpack.c.b16 %v1152, %v1148
    %v1429 = vpack.c.b16 %v1153, %v1149
    %v1430 = vpack.c.b16 %v1154, %v1150
    %v1431 = vpack.c.b16 %v1155, %v1151
    %v1432 = vpack.c.b16 %v1160, %v1156
    %v1433 = vpack.c.b16 %v1161, %v1157
    %v1434 = vpack.c.b16 %v1162, %v1158
    %v1435 = vpack.c.b16 %v1163, %v1159
    %v1436 = vpack.c.b16 %v1168, %v1164
    %v1437 = vpack.c.b16 %v1169, %v1165
    %v1438 = vpack.c.b16 %v1170, %v1166
    %v1439 = vpack.c.b16 %v1171, %v1167
    %v1440 = vpack.c.b16 %v1176, %v1172
    %v1441 = vpack.c.b16 %v1177, %v1173
    %v1442 = vpack.c.b16 %v1178, %v1174
    %v1443 = vpack.c.b16 %v1179, %v1175
    %v1444 = vpack.c.b16 %v1184, %v1180
    %v1445 = vpack.c.b16 %v1185, %v1181
    %v1446 = vpack.c.b16 %v1186, %v1182
    %v1447 = vpack.c.b16 %v1187, %v1183
    %v1448 = vpack.c.b16 %v1192, %v1188
    %v1449 = vpack.c.b16 %v1193, %v1189
    %v1450 = vpack.c.b16 %v1194, %v1190
    %v1451 = vpack.c.b16 %v1195, %v1191
    %1708 = vmatprep.subr.bf16.mxu0 %v1197
    %1709 = vmatpush1.bf16.msra.mxu0 %v1196
    %1710 = vmatprep.subr.bf16.mxu0 %v1201
    %1711 = vmatpush1.bf16.msra.mxu0 %v1200
    %1712 = vmatprep.subr.bf16.mxu0 %v1205
    %1713 = vmatpush1.bf16.msra.mxu0 %v1204
    %1714 = vmatprep.subr.bf16.mxu0 %v1209
    %1715 = vmatpush1.bf16.msra.mxu0 %v1208
    %1716 = vmatprep.subr.bf16.mxu0 %v1213
    %1717 = vmatpush1.bf16.msra.mxu0 %v1212
    %1718 = vmatprep.subr.bf16.mxu0 %v1217
    %1719 = vmatpush1.bf16.msra.mxu0 %v1216
    %1720 = vmatprep.subr.bf16.mxu0 %v1221
    %1721 = vmatpush1.bf16.msra.mxu0 %v1220
    %1722 = vmatprep.subr.bf16.mxu0 %v1225
    %1723 = vmatpush1.bf16.msra.mxu0 %v1224
    %1724 = vmatprep.subr.bf16.mxu0 %v1229
    %1725 = vmatpush1.bf16.msra.mxu0 %v1228
    %1726 = vmatprep.subr.bf16.mxu0 %v1233
    %1727 = vmatpush1.bf16.msra.mxu0 %v1232
    %1728 = vmatprep.subr.bf16.mxu0 %v1237
    %1729 = vmatpush1.bf16.msra.mxu0 %v1236
    %1730 = vmatprep.subr.bf16.mxu0 %v1241
    %1731 = vmatpush1.bf16.msra.mxu0 %v1240
    %1732 = vmatprep.subr.bf16.mxu0 %v1245
    %1733 = vmatpush1.bf16.msra.mxu0 %v1244
    %1734 = vmatprep.subr.bf16.mxu0 %v1249
    %1735 = vmatpush1.bf16.msra.mxu0 %v1248
    %1736 = vmatprep.subr.bf16.mxu0 %v1253
    %1737 = vmatpush1.bf16.msra.mxu0 %v1252
    %1738 = vmatprep.subr.bf16.mxu0 %v1257
    %1739 = vmatpush1.bf16.msra.mxu0 %v1256
    %1740 = vmatprep.mubr.bf16.mxu0 %v413
    %1741 = vmatmul.mubr.bf16.gmra.mrb[0].mxu0 %v412
    %v1742 = vpop.f32.mrb[0].mxu0
    %v1743 = vadd.f32 %v371, %v1742
    %v1744 = vpop.f32.mrb[0].mxu0
    %v1745 = vadd.f32 %v375, %v1744
    %v1746 = vpop.f32.mrb[0].mxu0
    %v1747 = vadd.f32 %v371, %v1746
    %v1748 = vpop.f32.mrb[0].mxu0
    %v1749 = vadd.f32 %v375, %v1748
    %1750 = vdwg.mxu0
    %1751 = vmatprep.subr.bf16.mxu0 %v1261
    %1752 = vmatpush1.bf16.msra.mxu0 %v1260
    %1753 = vmatprep.subr.bf16.mxu0 %v1265
    %1754 = vmatpush1.bf16.msra.mxu0 %v1264
    %1755 = vmatprep.subr.bf16.mxu0 %v1269
    %1756 = vmatpush1.bf16.msra.mxu0 %v1268
    %1757 = vmatprep.subr.bf16.mxu0 %v1273
    %1758 = vmatpush1.bf16.msra.mxu0 %v1272
    %1759 = vmatprep.subr.bf16.mxu0 %v1277
    %1760 = vmatpush1.bf16.msra.mxu0 %v1276
    %1761 = vmatprep.subr.bf16.mxu0 %v1281
    %1762 = vmatpush1.bf16.msra.mxu0 %v1280
    %1763 = vmatprep.subr.bf16.mxu0 %v1285
    %1764 = vmatpush1.bf16.msra.mxu0 %v1284
    %1765 = vmatprep.subr.bf16.mxu0 %v1289
    %1766 = vmatpush1.bf16.msra.mxu0 %v1288
    %1767 = vmatprep.subr.bf16.mxu0 %v1293
    %1768 = vmatpush1.bf16.msra.mxu0 %v1292
    %1769 = vmatprep.subr.bf16.mxu0 %v1297
    %1770 = vmatpush1.bf16.msra.mxu0 %v1296
    %1771 = vmatprep.subr.bf16.mxu0 %v1301
    %1772 = vmatpush1.bf16.msra.mxu0 %v1300
    %1773 = vmatprep.subr.bf16.mxu0 %v1305
    %1774 = vmatpush1.bf16.msra.mxu0 %v1304
    %1775 = vmatprep.subr.bf16.mxu0 %v1309
    %1776 = vmatpush1.bf16.msra.mxu0 %v1308
    %1777 = vmatprep.subr.bf16.mxu0 %v1313
    %1778 = vmatpush1.bf16.msra.mxu0 %v1312
    %1779 = vmatprep.subr.bf16.mxu0 %v1317
    %1780 = vmatpush1.bf16.msra.mxu0 %v1316
    %1781 = vmatprep.subr.bf16.mxu0 %v1321
    %1782 = vmatpush1.bf16.msra.mxu0 %v1320
    %1783 = vmatprep.mubr.bf16.mxu0 %v415
    %1784 = vmatmul.mubr.bf16.gmra.mrb[0].mxu0 %v414
    %v1785 = vpop.f32.mrb[0].mxu0
    %v1786 = vadd.f32 %v1743, %v1785
    %v1787 = vpop.f32.mrb[0].mxu0
    %v1788 = vadd.f32 %v1745, %v1787
    %v1789 = vpop.f32.mrb[0].mxu0
    %v1790 = vadd.f32 %v1747, %v1789
    %v1791 = vpop.f32.mrb[0].mxu0
    %v1792 = vadd.f32 %v1749, %v1791
    %1793 = vdwg.mxu0
    %1794 = vmatprep.subr.bf16.mxu0 %v1325
    %1795 = vmatpush1.bf16.msra.mxu0 %v1324
    %1796 = vmatprep.subr.bf16.mxu0 %v1329
    %1797 = vmatpush1.bf16.msra.mxu0 %v1328
    %1798 = vmatprep.subr.bf16.mxu0 %v1333
    %1799 = vmatpush1.bf16.msra.mxu0 %v1332
    %1800 = vmatprep.subr.bf16.mxu0 %v1337
    %1801 = vmatpush1.bf16.msra.mxu0 %v1336
    %1802 = vmatprep.subr.bf16.mxu0 %v1341
    %1803 = vmatpush1.bf16.msra.mxu0 %v1340
    %1804 = vmatprep.subr.bf16.mxu0 %v1345
    %1805 = vmatpush1.bf16.msra.mxu0 %v1344
    %1806 = vmatprep.subr.bf16.mxu0 %v1349
    %1807 = vmatpush1.bf16.msra.mxu0 %v1348
    %1808 = vmatprep.subr.bf16.mxu0 %v1353
    %1809 = vmatpush1.bf16.msra.mxu0 %v1352
    %1810 = vmatprep.subr.bf16.mxu0 %v1357
    %1811 = vmatpush1.bf16.msra.mxu0 %v1356
    %1812 = vmatprep.subr.bf16.mxu0 %v1361
    %1813 = vmatpush1.bf16.msra.mxu0 %v1360
    %1814 = vmatprep.subr.bf16.mxu0 %v1365
    %1815 = vmatpush1.bf16.msra.mxu0 %v1364
    %1816 = vmatprep.subr.bf16.mxu0 %v1369
    %1817 = vmatpush1.bf16.msra.mxu0 %v1368
    %1818 = vmatprep.subr.bf16.mxu0 %v1373
    %1819 = vmatpush1.bf16.msra.mxu0 %v1372
    %1820 = vmatprep.subr.bf16.mxu0 %v1377
    %1821 = vmatpush1.bf16.msra.mxu0 %v1376
    %1822 = vmatprep.subr.bf16.mxu0 %v1381
    %1823 = vmatpush1.bf16.msra.mxu0 %v1380
    %1824 = vmatprep.subr.bf16.mxu0 %v1385
    %1825 = vmatpush1.bf16.msra.mxu0 %v1384
    %1826 = vmatprep.mubr.bf16.mxu0 %v417
    %1827 = vmatmul.mubr.bf16.gmra.mrb[0].mxu0 %v416
    %v1828 = vpop.f32.mrb[0].mxu0
    %v1829 = vadd.f32 %v1786, %v1828
    %v1830 = vpop.f32.mrb[0].mxu0
    %v1831 = vadd.f32 %v1788, %v1830
    %v1832 = vpop.f32.mrb[0].mxu0
    %v1833 = vadd.f32 %v1790, %v1832
    %v1834 = vpop.f32.mrb[0].mxu0
    %v1835 = vadd.f32 %v1792, %v1834
    %1836 = vdwg.mxu0
    %1837 = vmatprep.subr.bf16.mxu0 %v1389
    %1838 = vmatpush1.bf16.msra.mxu0 %v1388
    %1839 = vmatprep.subr.bf16.mxu0 %v1393
    %1840 = vmatpush1.bf16.msra.mxu0 %v1392
    %1841 = vmatprep.subr.bf16.mxu0 %v1397
    %1842 = vmatpush1.bf16.msra.mxu0 %v1396
    %1843 = vmatprep.subr.bf16.mxu0 %v1401
    %1844 = vmatpush1.bf16.msra.mxu0 %v1400
    %1845 = vmatprep.subr.bf16.mxu0 %v1405
    %1846 = vmatpush1.bf16.msra.mxu0 %v1404
    %1847 = vmatprep.subr.bf16.mxu0 %v1409
    %1848 = vmatpush1.bf16.msra.mxu0 %v1408
    %1849 = vmatprep.subr.bf16.mxu0 %v1413
    %1850 = vmatpush1.bf16.msra.mxu0 %v1412
    %1851 = vmatprep.subr.bf16.mxu0 %v1417
    %1852 = vmatpush1.bf16.msra.mxu0 %v1416
    %1853 = vmatprep.subr.bf16.mxu0 %v1421
    %1854 = vmatpush1.bf16.msra.mxu0 %v1420
    %1855 = vmatprep.subr.bf16.mxu0 %v1425
    %1856 = vmatpush1.bf16.msra.mxu0 %v1424
    %1857 = vmatprep.subr.bf16.mxu0 %v1429
    %1858 = vmatpush1.bf16.msra.mxu0 %v1428
    %1859 = vmatprep.subr.bf16.mxu0 %v1433
    %1860 = vmatpush1.bf16.msra.mxu0 %v1432
    %1861 = vmatprep.subr.bf16.mxu0 %v1437
    %1862 = vmatpush1.bf16.msra.mxu0 %v1436
    %1863 = vmatprep.subr.bf16.mxu0 %v1441
    %1864 = vmatpush1.bf16.msra.mxu0 %v1440
    %1865 = vmatprep.subr.bf16.mxu0 %v1445
    %1866 = vmatpush1.bf16.msra.mxu0 %v1444
    %1867 = vmatprep.subr.bf16.mxu0 %v1449
    %1868 = vmatpush1.bf16.msra.mxu0 %v1448
    %1869 = vmatprep.mubr.bf16.mxu0 %v419
    %1870 = vmatmul.mubr.bf16.gmra.mrb[0].mxu0 %v418
    %v1871 = vpop.f32.mrb[0].mxu0
    %v1872 = vadd.f32 %v1829, %v1871
    %v1873 = vpop.f32.mrb[0].mxu0
    %v1874 = vadd.f32 %v1831, %v1873
    %v1875 = vpop.f32.mrb[0].mxu0
    %v1876 = vadd.f32 %v1833, %v1875
    %v1877 = vpop.f32.mrb[0].mxu0
    %v1878 = vadd.f32 %v1835, %v1877
    %1879 = vdwg.mxu0
    %1880 = vmatprep.subr.bf16.mxu0 %v1199
    %1881 = vmatpush1.bf16.msra.mxu0 %v1198
    %1882 = vmatprep.subr.bf16.mxu0 %v1203
    %1883 = vmatpush1.bf16.msra.mxu0 %v1202
    %1884 = vmatprep.subr.bf16.mxu0 %v1207
    %1885 = vmatpush1.bf16.msra.mxu0 %v1206
    %1886 = vmatprep.subr.bf16.mxu0 %v1211
    %1887 = vmatpush1.bf16.msra.mxu0 %v1210
    %1888 = vmatprep.subr.bf16.mxu0 %v1215
    %1889 = vmatpush1.bf16.msra.mxu0 %v1214
    %1890 = vmatprep.subr.bf16.mxu0 %v1219
    %1891 = vmatpush1.bf16.msra.mxu0 %v1218
    %1892 = vmatprep.subr.bf16.mxu0 %v1223
    %1893 = vmatpush1.bf16.msra.mxu0 %v1222
    %1894 = vmatprep.subr.bf16.mxu0 %v1227
    %1895 = vmatpush1.bf16.msra.mxu0 %v1226
    %1896 = vmatprep.subr.bf16.mxu0 %v1231
    %1897 = vmatpush1.bf16.msra.mxu0 %v1230
    %1898 = vmatprep.subr.bf16.mxu0 %v1235
    %1899 = vmatpush1.bf16.msra.mxu0 %v1234
    %1900 = vmatprep.subr.bf16.mxu0 %v1239
    %1901 = vmatpush1.bf16.msra.mxu0 %v1238
    %1902 = vmatprep.subr.bf16.mxu0 %v1243
    %1903 = vmatpush1.bf16.msra.mxu0 %v1242
    %1904 = vmatprep.subr.bf16.mxu0 %v1247
    %1905 = vmatpush1.bf16.msra.mxu0 %v1246
    %1906 = vmatprep.subr.bf16.mxu0 %v1251
    %1907 = vmatpush1.bf16.msra.mxu0 %v1250
    %1908 = vmatprep.subr.bf16.mxu0 %v1255
    %1909 = vmatpush1.bf16.msra.mxu0 %v1254
    %1910 = vmatprep.subr.bf16.mxu0 %v1259
    %1911 = vmatpush1.bf16.msra.mxu0 %v1258
    %1912 = vmatprep.mubr.bf16.mxu0 %v413
    %1913 = vmatmul.mubr.bf16.gmra.mrb[0].mxu0 %v412
    %v1914 = vpop.f32.mrb[0].mxu0
    %v1915 = vadd.f32 %v379, %v1914
    %v1916 = vpop.f32.mrb[0].mxu0
    %v1917 = vadd.f32 %v383, %v1916
    %v1918 = vpop.f32.mrb[0].mxu0
    %v1919 = vadd.f32 %v379, %v1918
    %v1920 = vpop.f32.mrb[0].mxu0
    %v1921 = vadd.f32 %v383, %v1920
    %1922 = vdwg.mxu0
    %1923 = vmatprep.subr.bf16.mxu0 %v1263
    %1924 = vmatpush1.bf16.msra.mxu0 %v1262
    %1925 = vmatprep.subr.bf16.mxu0 %v1267
    %1926 = vmatpush1.bf16.msra.mxu0 %v1266
    %1927 = vmatprep.subr.bf16.mxu0 %v1271
    %1928 = vmatpush1.bf16.msra.mxu0 %v1270
    %1929 = vmatprep.subr.bf16.mxu0 %v1275
    %1930 = vmatpush1.bf16.msra.mxu0 %v1274
    %1931 = vmatprep.subr.bf16.mxu0 %v1279
    %1932 = vmatpush1.bf16.msra.mxu0 %v1278
    %1933 = vmatprep.subr.bf16.mxu0 %v1283
    %1934 = vmatpush1.bf16.msra.mxu0 %v1282
    %1935 = vmatprep.subr.bf16.mxu0 %v1287
    %1936 = vmatpush1.bf16.msra.mxu0 %v1286
    %1937 = vmatprep.subr.bf16.mxu0 %v1291
    %1938 = vmatpush1.bf16.msra.mxu0 %v1290
    %1939 = vmatprep.subr.bf16.mxu0 %v1295
    %1940 = vmatpush1.bf16.msra.mxu0 %v1294
    %1941 = vmatprep.subr.bf16.mxu0 %v1299
    %1942 = vmatpush1.bf16.msra.mxu0 %v1298
    %1943 = vmatprep.subr.bf16.mxu0 %v1303
    %1944 = vmatpush1.bf16.msra.mxu0 %v1302
    %1945 = vmatprep.subr.bf16.mxu0 %v1307
    %1946 = vmatpush1.bf16.msra.mxu0 %v1306
    %1947 = vmatprep.subr.bf16.mxu0 %v1311
    %1948 = vmatpush1.bf16.msra.mxu0 %v1310
    %1949 = vmatprep.subr.bf16.mxu0 %v1315
    %1950 = vmatpush1.bf16.msra.mxu0 %v1314
    %1951 = vmatprep.subr.bf16.mxu0 %v1319
    %1952 = vmatpush1.bf16.msra.mxu0 %v1318
    %1953 = vmatprep.subr.bf16.mxu0 %v1323
    %1954 = vmatpush1.bf16.msra.mxu0 %v1322
    %1955 = vmatprep.mubr.bf16.mxu0 %v415
    %1956 = vmatmul.mubr.bf16.gmra.mrb[0].mxu0 %v414
    %v1957 = vpop.f32.mrb[0].mxu0
    %v1958 = vadd.f32 %v1915, %v1957
    %v1959 = vpop.f32.mrb[0].mxu0
    %v1960 = vadd.f32 %v1917, %v1959
    %v1961 = vpop.f32.mrb[0].mxu0
    %v1962 = vadd.f32 %v1919, %v1961
    %v1963 = vpop.f32.mrb[0].mxu0
    %v1964 = vadd.f32 %v1921, %v1963
    %1965 = vdwg.mxu0
    %1966 = vmatprep.subr.bf16.mxu0 %v1327
    %1967 = vmatpush1.bf16.msra.mxu0 %v1326
    %1968 = vmatprep.subr.bf16.mxu0 %v1331
    %1969 = vmatpush1.bf16.msra.mxu0 %v1330
    %1970 = vmatprep.subr.bf16.mxu0 %v1335
    %1971 = vmatpush1.bf16.msra.mxu0 %v1334
    %1972 = vmatprep.subr.bf16.mxu0 %v1339
    %1973 = vmatpush1.bf16.msra.mxu0 %v1338
    %1974 = vmatprep.subr.bf16.mxu0 %v1343
    %1975 = vmatpush1.bf16.msra.mxu0 %v1342
    %1976 = vmatprep.subr.bf16.mxu0 %v1347
    %1977 = vmatpush1.bf16.msra.mxu0 %v1346
    %1978 = vmatprep.subr.bf16.mxu0 %v1351
    %1979 = vmatpush1.bf16.msra.mxu0 %v1350
    %1980 = vmatprep.subr.bf16.mxu0 %v1355
    %1981 = vmatpush1.bf16.msra.mxu0 %v1354
    %1982 = vmatprep.subr.bf16.mxu0 %v1359
    %1983 = vmatpush1.bf16.msra.mxu0 %v1358
    %1984 = vmatprep.subr.bf16.mxu0 %v1363
    %1985 = vmatpush1.bf16.msra.mxu0 %v1362
    %1986 = vmatprep.subr.bf16.mxu0 %v1367
    %1987 = vmatpush1.bf16.msra.mxu0 %v1366
    %1988 = vmatprep.subr.bf16.mxu0 %v1371
    %1989 = vmatpush1.bf16.msra.mxu0 %v1370
    %1990 = vmatprep.subr.bf16.mxu0 %v1375
    %1991 = vmatpush1.bf16.msra.mxu0 %v1374
    %1992 = vmatprep.subr.bf16.mxu0 %v1379
    %1993 = vmatpush1.bf16.msra.mxu0 %v1378
    %1994 = vmatprep.subr.bf16.mxu0 %v1383
    %1995 = vmatpush1.bf16.msra.mxu0 %v1382
    %1996 = vmatprep.subr.bf16.mxu0 %v1387
    %1997 = vmatpush1.bf16.msra.mxu0 %v1386
    %1998 = vmatprep.mubr.bf16.mxu0 %v417
    %1999 = vmatmul.mubr.bf16.gmra.mrb[0].mxu0 %v416
    %v2000 = vpop.f32.mrb[0].mxu0
    %v2001 = vadd.f32 %v1958, %v2000
    %v2002 = vpop.f32.mrb[0].mxu0
    %v2003 = vadd.f32 %v1960, %v2002
    %v2004 = vpop.f32.mrb[0].mxu0
    %v2005 = vadd.f32 %v1962, %v2004
    %v2006 = vpop.f32.mrb[0].mxu0
    %v2007 = vadd.f32 %v1964, %v2006
    %2008 = vdwg.mxu0
    %2009 = vmatprep.subr.bf16.mxu0 %v1391
    %2010 = vmatpush1.bf16.msra.mxu0 %v1390
    %2011 = vmatprep.subr.bf16.mxu0 %v1395
    %2012 = vmatpush1.bf16.msra.mxu0 %v1394
    %2013 = vmatprep.subr.bf16.mxu0 %v1399
    %2014 = vmatpush1.bf16.msra.mxu0 %v1398
    %2015 = vmatprep.subr.bf16.mxu0 %v1403
    %2016 = vmatpush1.bf16.msra.mxu0 %v1402
    %2017 = vmatprep.subr.bf16.mxu0 %v1407
    %2018 = vmatpush1.bf16.msra.mxu0 %v1406
    %2019 = vmatprep.subr.bf16.mxu0 %v1411
    %2020 = vmatpush1.bf16.msra.mxu0 %v1410
    %2021 = vmatprep.subr.bf16.mxu0 %v1415
    %2022 = vmatpush1.bf16.msra.mxu0 %v1414
    %2023 = vmatprep.subr.bf16.mxu0 %v1419
    %2024 = vmatpush1.bf16.msra.mxu0 %v1418
    %2025 = vmatprep.subr.bf16.mxu0 %v1423
    %2026 = vmatpush1.bf16.msra.mxu0 %v1422
    %2027 = vmatprep.subr.bf16.mxu0 %v1427
    %2028 = vmatpush1.bf16.msra.mxu0 %v1426
    %2029 = vmatprep.subr.bf16.mxu0 %v1431
    %2030 = vmatpush1.bf16.msra.mxu0 %v1430
    %2031 = vmatprep.subr.bf16.mxu0 %v1435
    %2032 = vmatpush1.bf16.msra.mxu0 %v1434
    %2033 = vmatprep.subr.bf16.mxu0 %v1439
    %2034 = vmatpush1.bf16.msra.mxu0 %v1438
    %2035 = vmatprep.subr.bf16.mxu0 %v1443
    %2036 = vmatpush1.bf16.msra.mxu0 %v1442
    %2037 = vmatprep.subr.bf16.mxu0 %v1447
    %2038 = vmatpush1.bf16.msra.mxu0 %v1446
    %2039 = vmatprep.subr.bf16.mxu0 %v1451
    %2040 = vmatpush1.bf16.msra.mxu0 %v1450
    %2041 = vmatprep.mubr.bf16.mxu0 %v419
    %2042 = vmatmul.mubr.bf16.gmra.mrb[0].mxu0 %v418
    %v2043 = vpop.f32.mrb[0].mxu0
    %v2044 = vadd.f32 %v2001, %v2043
    %v2045 = vpop.f32.mrb[0].mxu0
    %v2046 = vadd.f32 %v2003, %v2045
    %v2047 = vpop.f32.mrb[0].mxu0
    %v2048 = vadd.f32 %v2005, %v2047
    %v2049 = vpop.f32.mrb[0].mxu0
    %v2050 = vadd.f32 %v2007, %v2049
    %2051 = vdwg.mxu0
    %v2052 = vmax.f32 %v1872, 0.0
    %v2053 = vmax.f32 %v1874, 0.0
    %v2054 = vmax.f32 %v2044, 0.0
    %v2055 = vmax.f32 %v2046, 0.0
    %v2056 = vmax.f32 %v1876, 0.0
    %v2057 = vmax.f32 %v1878, 0.0
    %v2058 = vmax.f32 %v2048, 0.0
    %v2059 = vmax.f32 %v2050, 0.0
    %v2060 = vpack.c.bf16 %v2056, %v2052
    %v2061 = vpack.c.bf16 %v2057, %v2053
    %v2062 = vpack.c.bf16 %v2058, %v2054
    %v2063 = vpack.c.bf16 %v2059, %v2055
    %v2064 = vld [vmem:[#allocation7] sm:$0xff]
    %v2065 = vld [vmem:[#allocation7 + $0x8] sm:$0xff]
    %v2066 = vld [vmem:[#allocation7 + $0x10] sm:$0xff]
    %v2067 = vld [vmem:[#allocation7 + $0x18] sm:$0xff]
    %v2068 = vld [vmem:[#allocation7 + $0x20] sm:$0xff]
    %v2069 = vld [vmem:[#allocation7 + $0x28] sm:$0xff]
    %v2070 = vld [vmem:[#allocation7 + $0x30] sm:$0xff]
    %v2071 = vld [vmem:[#allocation7 + $0x38] sm:$0xff]
    %v2072 = vld [vmem:[#allocation7 + $0x40] sm:$0xff]
    %v2073 = vld [vmem:[#allocation7 + $0x48] sm:$0xff]
    %v2074 = vld [vmem:[#allocation7 + $0x50] sm:$0xff]
    %v2075 = vld [vmem:[#allocation7 + $0x58] sm:$0xff]
    %v2076 = vld [vmem:[#allocation7 + $0x60] sm:$0xff]
    %v2077 = vld [vmem:[#allocation7 + $0x68] sm:$0xff]
    %v2078 = vld [vmem:[#allocation7 + $0x70] sm:$0xff]
    %v2079 = vld [vmem:[#allocation7 + $0x78] sm:$0xff]
    %v2080 = vld [vmem:[#allocation7 + $0x80] sm:$0xff]
    %v2081 = vld [vmem:[#allocation7 + $0x88] sm:$0xff]
    %v2082 = vld [vmem:[#allocation7 + $0x90] sm:$0xff]
    %v2083 = vld [vmem:[#allocation7 + $0x98] sm:$0xff]
    %v2084 = vld [vmem:[#allocation7 + $0xa0] sm:$0xff]
    %v2085 = vld [vmem:[#allocation7 + $0xa8] sm:$0xff]
    %v2086 = vld [vmem:[#allocation7 + $0xb0] sm:$0xff]
    %v2087 = vld [vmem:[#allocation7 + $0xb8] sm:$0xff]
    %v2088 = vld [vmem:[#allocation7 + $0xc0] sm:$0xff]
    %v2089 = vld [vmem:[#allocation7 + $0xc8] sm:$0xff]
    %v2090 = vld [vmem:[#allocation7 + $0xd0] sm:$0xff]
    %v2091 = vld [vmem:[#allocation7 + $0xd8] sm:$0xff]
    %v2092 = vld [vmem:[#allocation7 + $0xe0] sm:$0xff]
    %v2093 = vld [vmem:[#allocation7 + $0xe8] sm:$0xff]
    %v2094 = vld [vmem:[#allocation7 + $0xf0] sm:$0xff]
    %v2095 = vld [vmem:[#allocation7 + $0xf8] sm:$0xff]
    %v2096 = vld [vmem:[#allocation7 + $0x100] sm:$0xff]
    %v2097 = vld [vmem:[#allocation7 + $0x108] sm:$0xff]
    %v2098 = vld [vmem:[#allocation7 + $0x110] sm:$0xff]
    %v2099 = vld [vmem:[#allocation7 + $0x118] sm:$0xff]
    %v2100 = vld [vmem:[#allocation7 + $0x120] sm:$0xff]
    %v2101 = vld [vmem:[#allocation7 + $0x128] sm:$0xff]
    %v2102 = vld [vmem:[#allocation7 + $0x130] sm:$0xff]
    %v2103 = vld [vmem:[#allocation7 + $0x138] sm:$0xff]
    %v2104 = vld [vmem:[#allocation7 + $0x140] sm:$0xff]
    %v2105 = vld [vmem:[#allocation7 + $0x148] sm:$0xff]
    %v2106 = vld [vmem:[#allocation7 + $0x150] sm:$0xff]
    %v2107 = vld [vmem:[#allocation7 + $0x158] sm:$0xff]
    %v2108 = vld [vmem:[#allocation7 + $0x160] sm:$0xff]
    %v2109 = vld [vmem:[#allocation7 + $0x168] sm:$0xff]
    %v2110 = vld [vmem:[#allocation7 + $0x170] sm:$0xff]
    %v2111 = vld [vmem:[#allocation7 + $0x178] sm:$0xff]
    %v2112 = vld [vmem:[#allocation7 + $0x180] sm:$0xff]
    %v2113 = vld [vmem:[#allocation7 + $0x188] sm:$0xff]
    %v2114 = vld [vmem:[#allocation7 + $0x190] sm:$0xff]
    %v2115 = vld [vmem:[#allocation7 + $0x198] sm:$0xff]
    %v2116 = vld [vmem:[#allocation7 + $0x1a0] sm:$0xff]
    %v2117 = vld [vmem:[#allocation7 + $0x1a8] sm:$0xff]
    %v2118 = vld [vmem:[#allocation7 + $0x1b0] sm:$0xff]
    %v2119 = vld [vmem:[#allocation7 + $0x1b8] sm:$0xff]
    %v2120 = vld [vmem:[#allocation7 + $0x1c0] sm:$0xff]
    %v2121 = vld [vmem:[#allocation7 + $0x1c8] sm:$0xff]
    %v2122 = vld [vmem:[#allocation7 + $0x1d0] sm:$0xff]
    %v2123 = vld [vmem:[#allocation7 + $0x1d8] sm:$0xff]
    %v2124 = vld [vmem:[#allocation7 + $0x1e0] sm:$0xff]
    %v2125 = vld [vmem:[#allocation7 + $0x1e8] sm:$0xff]
    %v2126 = vld [vmem:[#allocation7 + $0x1f0] sm:$0xff]
    %v2127 = vld [vmem:[#allocation7 + $0x1f8] sm:$0xff]
    %v2128 = vld [vmem:[%s4] sm:$0x3]
    %v2130 = vlaneseq
    %v2131 = vshrl.u32 %v2130, 7
    %v2132 = vsub.s32 0, %v2131
    %v2133 = vrot.slane %v2128, %v2132
    %v2134 = vlaneseq
    %v2135 = vshrl.u32 %v2134, 7
    %v2136 = vsub.s32 1, %v2135
    %v2137 = vrot.slane %v2128, %v2136
    %v2204 = vunpack.c.l.b16 %v2064
    %v2205 = vunpack.c.h.b16 %v2064
    %v2206 = vunpack.c.l.b16 %v2065
    %v2207 = vunpack.c.h.b16 %v2065
    %v2208 = vunpack.c.l.b16 %v2066
    %v2209 = vunpack.c.h.b16 %v2066
    %v2210 = vunpack.c.l.b16 %v2067
    %v2211 = vunpack.c.h.b16 %v2067
    %v2212 = vunpack.c.l.b16 %v2068
    %v2213 = vunpack.c.h.b16 %v2068
    %v2214 = vunpack.c.l.b16 %v2069
    %v2215 = vunpack.c.h.b16 %v2069
    %v2216 = vunpack.c.l.b16 %v2070
    %v2217 = vunpack.c.h.b16 %v2070
    %v2218 = vunpack.c.l.b16 %v2071
    %v2219 = vunpack.c.h.b16 %v2071
    %v2220 = vunpack.c.l.b16 %v2072
    %v2221 = vunpack.c.h.b16 %v2072
    %v2222 = vunpack.c.l.b16 %v2073
    %v2223 = vunpack.c.h.b16 %v2073
    %v2224 = vunpack.c.l.b16 %v2074
    %v2225 = vunpack.c.h.b16 %v2074
    %v2226 = vunpack.c.l.b16 %v2075
    %v2227 = vunpack.c.h.b16 %v2075
    %v2228 = vunpack.c.l.b16 %v2076
    %v2229 = vunpack.c.h.b16 %v2076
    %v2230 = vunpack.c.l.b16 %v2077
    %v2231 = vunpack.c.h.b16 %v2077
    %v2232 = vunpack.c.l.b16 %v2078
    %v2233 = vunpack.c.h.b16 %v2078
    %v2234 = vunpack.c.l.b16 %v2079
    %v2235 = vunpack.c.h.b16 %v2079
    %v2236 = vunpack.c.l.b16 %v2080
    %v2237 = vunpack.c.h.b16 %v2080
    %v2238 = vunpack.c.l.b16 %v2081
    %v2239 = vunpack.c.h.b16 %v2081
    %v2240 = vunpack.c.l.b16 %v2082
    %v2241 = vunpack.c.h.b16 %v2082
    %v2242 = vunpack.c.l.b16 %v2083
    %v2243 = vunpack.c.h.b16 %v2083
    %v2244 = vunpack.c.l.b16 %v2084
    %v2245 = vunpack.c.h.b16 %v2084
    %v2246 = vunpack.c.l.b16 %v2085
    %v2247 = vunpack.c.h.b16 %v2085
    %v2248 = vunpack.c.l.b16 %v2086
    %v2249 = vunpack.c.h.b16 %v2086
    %v2250 = vunpack.c.l.b16 %v2087
    %v2251 = vunpack.c.h.b16 %v2087
    %v2252 = vunpack.c.l.b16 %v2088
    %v2253 = vunpack.c.h.b16 %v2088
    %v2254 = vunpack.c.l.b16 %v2089
    %v2255 = vunpack.c.h.b16 %v2089
    %v2256 = vunpack.c.l.b16 %v2090
    %v2257 = vunpack.c.h.b16 %v2090
    %v2258 = vunpack.c.l.b16 %v2091
    %v2259 = vunpack.c.h.b16 %v2091
    %v2260 = vunpack.c.l.b16 %v2092
    %v2261 = vunpack.c.h.b16 %v2092
    %v2262 = vunpack.c.l.b16 %v2093
    %v2263 = vunpack.c.h.b16 %v2093
    %v2264 = vunpack.c.l.b16 %v2094
    %v2265 = vunpack.c.h.b16 %v2094
    %v2266 = vunpack.c.l.b16 %v2095
    %v2267 = vunpack.c.h.b16 %v2095
    %v2268 = vunpack.c.l.b16 %v2096
    %v2269 = vunpack.c.h.b16 %v2096
    %v2270 = vunpack.c.l.b16 %v2097
    %v2271 = vunpack.c.h.b16 %v2097
    %v2272 = vunpack.c.l.b16 %v2098
    %v2273 = vunpack.c.h.b16 %v2098
    %v2274 = vunpack.c.l.b16 %v2099
    %v2275 = vunpack.c.h.b16 %v2099
    %v2276 = vunpack.c.l.b16 %v2100
    %v2277 = vunpack.c.h.b16 %v2100
    %v2278 = vunpack.c.l.b16 %v2101
    %v2279 = vunpack.c.h.b16 %v2101
    %v2280 = vunpack.c.l.b16 %v2102
    %v2281 = vunpack.c.h.b16 %v2102
    %v2282 = vunpack.c.l.b16 %v2103
    %v2283 = vunpack.c.h.b16 %v2103
    %v2284 = vunpack.c.l.b16 %v2104
    %v2285 = vunpack.c.h.b16 %v2104
    %v2286 = vunpack.c.l.b16 %v2105
    %v2287 = vunpack.c.h.b16 %v2105
    %v2288 = vunpack.c.l.b16 %v2106
    %v2289 = vunpack.c.h.b16 %v2106
    %v2290 = vunpack.c.l.b16 %v2107
    %v2291 = vunpack.c.h.b16 %v2107
    %v2292 = vunpack.c.l.b16 %v2108
    %v2293 = vunpack.c.h.b16 %v2108
    %v2294 = vunpack.c.l.b16 %v2109
    %v2295 = vunpack.c.h.b16 %v2109
    %v2296 = vunpack.c.l.b16 %v2110
    %v2297 = vunpack.c.h.b16 %v2110
    %v2298 = vunpack.c.l.b16 %v2111
    %v2299 = vunpack.c.h.b16 %v2111
    %v2300 = vunpack.c.l.b16 %v2112
    %v2301 = vunpack.c.h.b16 %v2112
    %v2302 = vunpack.c.l.b16 %v2113
    %v2303 = vunpack.c.h.b16 %v2113
    %v2304 = vunpack.c.l.b16 %v2114
    %v2305 = vunpack.c.h.b16 %v2114
    %v2306 = vunpack.c.l.b16 %v2115
    %v2307 = vunpack.c.h.b16 %v2115
    %v2308 = vunpack.c.l.b16 %v2116
    %v2309 = vunpack.c.h.b16 %v2116
    %v2310 = vunpack.c.l.b16 %v2117
    %v2311 = vunpack.c.h.b16 %v2117
    %v2312 = vunpack.c.l.b16 %v2118
    %v2313 = vunpack.c.h.b16 %v2118
    %v2314 = vunpack.c.l.b16 %v2119
    %v2315 = vunpack.c.h.b16 %v2119
    %v2316 = vunpack.c.l.b16 %v2120
    %v2317 = vunpack.c.h.b16 %v2120
    %v2318 = vunpack.c.l.b16 %v2121
    %v2319 = vunpack.c.h.b16 %v2121
    %v2320 = vunpack.c.l.b16 %v2122
    %v2321 = vunpack.c.h.b16 %v2122
    %v2322 = vunpack.c.l.b16 %v2123
    %v2323 = vunpack.c.h.b16 %v2123
    %v2324 = vunpack.c.l.b16 %v2124
    %v2325 = vunpack.c.h.b16 %v2124
    %v2326 = vunpack.c.l.b16 %v2125
    %v2327 = vunpack.c.h.b16 %v2125
    %v2328 = vunpack.c.l.b16 %v2126
    %v2329 = vunpack.c.h.b16 %v2126
    %v2330 = vunpack.c.l.b16 %v2127
    %v2331 = vunpack.c.h.b16 %v2127
    %v2332 = vpack.c.b16 %v2206, %v2204
    %v2333 = vpack.c.b16 %v2207, %v2205
    %v2334 = vpack.c.b16 %v2210, %v2208
    %v2335 = vpack.c.b16 %v2211, %v2209
    %v2336 = vpack.c.b16 %v2214, %v2212
    %v2337 = vpack.c.b16 %v2215, %v2213
    %v2338 = vpack.c.b16 %v2218, %v2216
    %v2339 = vpack.c.b16 %v2219, %v2217
    %v2340 = vpack.c.b16 %v2222, %v2220
    %v2341 = vpack.c.b16 %v2223, %v2221
    %v2342 = vpack.c.b16 %v2226, %v2224
    %v2343 = vpack.c.b16 %v2227, %v2225
    %v2344 = vpack.c.b16 %v2230, %v2228
    %v2345 = vpack.c.b16 %v2231, %v2229
    %v2346 = vpack.c.b16 %v2234, %v2232
    %v2347 = vpack.c.b16 %v2235, %v2233
    %v2348 = vpack.c.b16 %v2238, %v2236
    %v2349 = vpack.c.b16 %v2239, %v2237
    %v2350 = vpack.c.b16 %v2242, %v2240
    %v2351 = vpack.c.b16 %v2243, %v2241
    %v2352 = vpack.c.b16 %v2246, %v2244
    %v2353 = vpack.c.b16 %v2247, %v2245
    %v2354 = vpack.c.b16 %v2250, %v2248
    %v2355 = vpack.c.b16 %v2251, %v2249
    %v2356 = vpack.c.b16 %v2254, %v2252
    %v2357 = vpack.c.b16 %v2255, %v2253
    %v2358 = vpack.c.b16 %v2258, %v2256
    %v2359 = vpack.c.b16 %v2259, %v2257
    %v2360 = vpack.c.b16 %v2262, %v2260
    %v2361 = vpack.c.b16 %v2263, %v2261
    %v2362 = vpack.c.b16 %v2266, %v2264
    %v2363 = vpack.c.b16 %v2267, %v2265
    %v2364 = vpack.c.b16 %v2270, %v2268
    %v2365 = vpack.c.b16 %v2271, %v2269
    %v2366 = vpack.c.b16 %v2274, %v2272
    %v2367 = vpack.c.b16 %v2275, %v2273
    %v2368 = vpack.c.b16 %v2278, %v2276
    %v2369 = vpack.c.b16 %v2279, %v2277
    %v2370 = vpack.c.b16 %v2282, %v2280
    %v2371 = vpack.c.b16 %v2283, %v2281
    %v2372 = vpack.c.b16 %v2286, %v2284
    %v2373 = vpack.c.b16 %v2287, %v2285
    %v2374 = vpack.c.b16 %v2290, %v2288
    %v2375 = vpack.c.b16 %v2291, %v2289
    %v2376 = vpack.c.b16 %v2294, %v2292
    %v2377 = vpack.c.b16 %v2295, %v2293
    %v2378 = vpack.c.b16 %v2298, %v2296
    %v2379 = vpack.c.b16 %v2299, %v2297
    %v2380 = vpack.c.b16 %v2302, %v2300
    %v2381 = vpack.c.b16 %v2303, %v2301
    %v2382 = vpack.c.b16 %v2306, %v2304
    %v2383 = vpack.c.b16 %v2307, %v2305
    %v2384 = vpack.c.b16 %v2310, %v2308
    %v2385 = vpack.c.b16 %v2311, %v2309
    %v2386 = vpack.c.b16 %v2314, %v2312
    %v2387 = vpack.c.b16 %v2315, %v2313
    %v2388 = vpack.c.b16 %v2318, %v2316
    %v2389 = vpack.c.b16 %v2319, %v2317
    %v2390 = vpack.c.b16 %v2322, %v2320
    %v2391 = vpack.c.b16 %v2323, %v2321
    %v2392 = vpack.c.b16 %v2326, %v2324
    %v2393 = vpack.c.b16 %v2327, %v2325
    %v2394 = vpack.c.b16 %v2330, %v2328
    %v2395 = vpack.c.b16 %v2331, %v2329
    %2460 = vmatprep.subr.bf16.mxu0 %v2333
    %2461 = vmatpush1.bf16.msra.mxu0 %v2332
    %2462 = vmatprep.subr.bf16.mxu0 %v2335
    %2463 = vmatpush1.bf16.msra.mxu0 %v2334
    %2464 = vmatprep.subr.bf16.mxu0 %v2337
    %2465 = vmatpush1.bf16.msra.mxu0 %v2336
    %2466 = vmatprep.subr.bf16.mxu0 %v2339
    %2467 = vmatpush1.bf16.msra.mxu0 %v2338
    %2468 = vmatprep.subr.bf16.mxu0 %v2341
    %2469 = vmatpush1.bf16.msra.mxu0 %v2340
    %2470 = vmatprep.subr.bf16.mxu0 %v2343
    %2471 = vmatpush1.bf16.msra.mxu0 %v2342
    %2472 = vmatprep.subr.bf16.mxu0 %v2345
    %2473 = vmatpush1.bf16.msra.mxu0 %v2344
    %2474 = vmatprep.subr.bf16.mxu0 %v2347
    %2475 = vmatpush1.bf16.msra.mxu0 %v2346
    %2476 = vmatprep.subr.bf16.mxu0 %v2349
    %2477 = vmatpush1.bf16.msra.mxu0 %v2348
    %2478 = vmatprep.subr.bf16.mxu0 %v2351
    %2479 = vmatpush1.bf16.msra.mxu0 %v2350
    %2480 = vmatprep.subr.bf16.mxu0 %v2353
    %2481 = vmatpush1.bf16.msra.mxu0 %v2352
    %2482 = vmatprep.subr.bf16.mxu0 %v2355
    %2483 = vmatpush1.bf16.msra.mxu0 %v2354
    %2484 = vmatprep.subr.bf16.mxu0 %v2357
    %2485 = vmatpush1.bf16.msra.mxu0 %v2356
    %2486 = vmatprep.subr.bf16.mxu0 %v2359
    %2487 = vmatpush1.bf16.msra.mxu0 %v2358
    %2488 = vmatprep.subr.bf16.mxu0 %v2361
    %2489 = vmatpush1.bf16.msra.mxu0 %v2360
    %2490 = vmatprep.subr.bf16.mxu0 %v2363
    %2491 = vmatpush1.bf16.msra.mxu0 %v2362
    %2492 = vmatprep.mubr.bf16.mxu0 %v2061
    %2493 = vmatmul.mubr.bf16.gmra.mrb[0].mxu0 %v2060
    %v2494 = vpop.f32.mrb[0].mxu0
    %v2495 = vadd.f32 %v2133, %v2494
    %v2496 = vpop.f32.mrb[0].mxu0
    %v2497 = vadd.f32 %v2137, %v2496
    %v2498 = vpop.f32.mrb[0].mxu0
    %v2499 = vadd.f32 %v2133, %v2498
    %v2500 = vpop.f32.mrb[0].mxu0
    %v2501 = vadd.f32 %v2137, %v2500
    %2502 = vdwg.mxu0
    %2503 = vmatprep.subr.bf16.mxu0 %v2365
    %2504 = vmatpush1.bf16.msra.mxu0 %v2364
    %2505 = vmatprep.subr.bf16.mxu0 %v2367
    %2506 = vmatpush1.bf16.msra.mxu0 %v2366
    %2507 = vmatprep.subr.bf16.mxu0 %v2369
    %2508 = vmatpush1.bf16.msra.mxu0 %v2368
    %2509 = vmatprep.subr.bf16.mxu0 %v2371
    %2510 = vmatpush1.bf16.msra.mxu0 %v2370
    %2511 = vmatprep.subr.bf16.mxu0 %v2373
    %2512 = vmatpush1.bf16.msra.mxu0 %v2372
    %2513 = vmatprep.subr.bf16.mxu0 %v2375
    %2514 = vmatpush1.bf16.msra.mxu0 %v2374
    %2515 = vmatprep.subr.bf16.mxu0 %v2377
    %2516 = vmatpush1.bf16.msra.mxu0 %v2376
    %2517 = vmatprep.subr.bf16.mxu0 %v2379
    %2518 = vmatpush1.bf16.msra.mxu0 %v2378
    %2519 = vmatprep.subr.bf16.mxu0 %v2381
    %2520 = vmatpush1.bf16.msra.mxu0 %v2380
    %2521 = vmatprep.subr.bf16.mxu0 %v2383
    %2522 = vmatpush1.bf16.msra.mxu0 %v2382
    %2523 = vmatprep.subr.bf16.mxu0 %v2385
    %2524 = vmatpush1.bf16.msra.mxu0 %v2384
    %2525 = vmatprep.subr.bf16.mxu0 %v2387
    %2526 = vmatpush1.bf16.msra.mxu0 %v2386
    %2527 = vmatprep.subr.bf16.mxu0 %v2389
    %2528 = vmatpush1.bf16.msra.mxu0 %v2388
    %2529 = vmatprep.subr.bf16.mxu0 %v2391
    %2530 = vmatpush1.bf16.msra.mxu0 %v2390
    %2531 = vmatprep.subr.bf16.mxu0 %v2393
    %2532 = vmatpush1.bf16.msra.mxu0 %v2392
    %2533 = vmatprep.subr.bf16.mxu0 %v2395
    %2534 = vmatpush1.bf16.msra.mxu0 %v2394
    %2535 = vmatprep.mubr.bf16.mxu0 %v2063
    %2536 = vmatmul.mubr.bf16.gmra.mrb[0].mxu0 %v2062
    %v2537 = vpop.f32.mrb[0].mxu0
    %v2538 = vadd.f32 %v2495, %v2537
    %v2539 = vpop.f32.mrb[0].mxu0
    %v2540 = vadd.f32 %v2497, %v2539
    %v2541 = vpop.f32.mrb[0].mxu0
    %v2542 = vadd.f32 %v2499, %v2541
    %v2543 = vpop.f32.mrb[0].mxu0
    %v2544 = vadd.f32 %v2501, %v2543
    %2545 = vdwg.mxu0
    %v2546 = vmax.f32 %v2538, 0.0
    %v2547 = vmax.f32 %v2540, 0.0
    %v2548 = vmax.f32 %v2542, 0.0
    %v2549 = vmax.f32 %v2544, 0.0
    %v2550 = vpack.c.bf16 %v2548, %v2546
    %v2551 = vpack.c.bf16 %v2549, %v2547
    %v2552 = vld [vmem:[#allocation8] sm:$0xf]
    %v2553 = vld [vmem:[#allocation8 + $0x4] sm:$0xf]
    %v2554 = vld [vmem:[#allocation8 + $0x8] sm:$0xf]
    %v2555 = vld [vmem:[#allocation8 + $0xc] sm:$0xf]
    %v2556 = vld [vmem:[#allocation8 + $0x10] sm:$0xf]
    %v2557 = vld [vmem:[#allocation8 + $0x14] sm:$0xf]
    %v2558 = vld [vmem:[#allocation8 + $0x18] sm:$0xf]
    %v2559 = vld [vmem:[#allocation8 + $0x1c] sm:$0xf]
    %v2560 = vld [vmem:[#allocation8 + $0x20] sm:$0xf]
    %v2561 = vld [vmem:[#allocation8 + $0x24] sm:$0xf]
    %v2562 = vld [vmem:[#allocation8 + $0x28] sm:$0xf]
    %v2563 = vld [vmem:[#allocation8 + $0x2c] sm:$0xf]
    %v2564 = vld [vmem:[#allocation8 + $0x30] sm:$0xf]
    %v2565 = vld [vmem:[#allocation8 + $0x34] sm:$0xf]
    %v2566 = vld [vmem:[#allocation8 + $0x38] sm:$0xf]
    %v2567 = vld [vmem:[#allocation8 + $0x3c] sm:$0xf]
    %v2568 = vld [vmem:[#allocation8 + $0x40] sm:$0xf]
    %v2569 = vld [vmem:[#allocation8 + $0x44] sm:$0xf]
    %v2570 = vld [vmem:[#allocation8 + $0x48] sm:$0xf]
    %v2571 = vld [vmem:[#allocation8 + $0x4c] sm:$0xf]
    %v2572 = vld [vmem:[#allocation8 + $0x50] sm:$0xf]
    %v2573 = vld [vmem:[#allocation8 + $0x54] sm:$0xf]
    %v2574 = vld [vmem:[#allocation8 + $0x58] sm:$0xf]
    %v2575 = vld [vmem:[#allocation8 + $0x5c] sm:$0xf]
    %v2576 = vld [vmem:[#allocation8 + $0x60] sm:$0xf]
    %v2577 = vld [vmem:[#allocation8 + $0x64] sm:$0xf]
    %v2578 = vld [vmem:[#allocation8 + $0x68] sm:$0xf]
    %v2579 = vld [vmem:[#allocation8 + $0x6c] sm:$0xf]
    %v2580 = vld [vmem:[#allocation8 + $0x70] sm:$0xf]
    %v2581 = vld [vmem:[#allocation8 + $0x74] sm:$0xf]
    %v2582 = vld [vmem:[#allocation8 + $0x78] sm:$0xf]
    %v2583 = vld [vmem:[#allocation8 + $0x7c] sm:$0xf]
    %v2584 = vld [vmem:[%s6] sm:$0x1]
    %v2586 = vlaneseq
    %v2587 = vshrl.u32 %v2586, 7
    %v2588 = vsub.s32 0, %v2587
    %v2589 = vrot.slane %v2584, %v2588
    %v2623 = vunpack.c.l.b16 %v2552
    %v2624 = vunpack.c.l.b16 %v2553
    %v2625 = vunpack.c.l.b16 %v2554
    %v2626 = vunpack.c.l.b16 %v2555
    %v2627 = vunpack.c.l.b16 %v2556
    %v2628 = vunpack.c.l.b16 %v2557
    %v2629 = vunpack.c.l.b16 %v2558
    %v2630 = vunpack.c.l.b16 %v2559
    %v2631 = vunpack.c.l.b16 %v2560
    %v2632 = vunpack.c.l.b16 %v2561
    %v2633 = vunpack.c.l.b16 %v2562
    %v2634 = vunpack.c.l.b16 %v2563
    %v2635 = vunpack.c.l.b16 %v2564
    %v2636 = vunpack.c.l.b16 %v2565
    %v2637 = vunpack.c.l.b16 %v2566
    %v2638 = vunpack.c.l.b16 %v2567
    %v2639 = vunpack.c.l.b16 %v2568
    %v2640 = vunpack.c.l.b16 %v2569
    %v2641 = vunpack.c.l.b16 %v2570
    %v2642 = vunpack.c.l.b16 %v2571
    %v2643 = vunpack.c.l.b16 %v2572
    %v2644 = vunpack.c.l.b16 %v2573
    %v2645 = vunpack.c.l.b16 %v2574
    %v2646 = vunpack.c.l.b16 %v2575
    %v2647 = vunpack.c.l.b16 %v2576
    %v2648 = vunpack.c.l.b16 %v2577
    %v2649 = vunpack.c.l.b16 %v2578
    %v2650 = vunpack.c.l.b16 %v2579
    %v2651 = vunpack.c.l.b16 %v2580
    %v2652 = vunpack.c.l.b16 %v2581
    %v2653 = vunpack.c.l.b16 %v2582
    %v2654 = vunpack.c.l.b16 %v2583
    %v2655 = vpack.c.b16 %v2624, %v2623
    %v2656 = vpack.c.b16 %v2626, %v2625
    %v2657 = vpack.c.b16 %v2628, %v2627
    %v2658 = vpack.c.b16 %v2630, %v2629
    %v2659 = vpack.c.b16 %v2632, %v2631
    %v2660 = vpack.c.b16 %v2634, %v2633
    %v2661 = vpack.c.b16 %v2636, %v2635
    %v2662 = vpack.c.b16 %v2638, %v2637
    %v2663 = vpack.c.b16 %v2640, %v2639
    %v2664 = vpack.c.b16 %v2642, %v2641
    %v2665 = vpack.c.b16 %v2644, %v2643
    %v2666 = vpack.c.b16 %v2646, %v2645
    %v2667 = vpack.c.b16 %v2648, %v2647
    %v2668 = vpack.c.b16 %v2650, %v2649
    %v2669 = vpack.c.b16 %v2652, %v2651
    %v2670 = vpack.c.b16 %v2654, %v2653
    %2687 = vmatprep.subr.bf16.mxu0 0
    %2688 = vmatpush1.bf16.msra.mxu0 %v2655
    %2689 = vmatprep.subr.bf16.mxu0 0
    %2690 = vmatpush1.bf16.msra.mxu0 %v2656
    %2691 = vmatprep.subr.bf16.mxu0 0
    %2692 = vmatpush1.bf16.msra.mxu0 %v2657
    %2693 = vmatprep.subr.bf16.mxu0 0
    %2694 = vmatpush1.bf16.msra.mxu0 %v2658
    %2695 = vmatprep.subr.bf16.mxu0 0
    %2696 = vmatpush1.bf16.msra.mxu0 %v2659
    %2697 = vmatprep.subr.bf16.mxu0 0
    %2698 = vmatpush1.bf16.msra.mxu0 %v2660
    %2699 = vmatprep.subr.bf16.mxu0 0
    %2700 = vmatpush1.bf16.msra.mxu0 %v2661
    %2701 = vmatprep.subr.bf16.mxu0 0
    %2702 = vmatpush1.bf16.msra.mxu0 %v2662
    %2703 = vmatprep.subr.bf16.mxu0 0
    %2704 = vmatpush1.bf16.msra.mxu0 %v2663
    %2705 = vmatprep.subr.bf16.mxu0 0
    %2706 = vmatpush1.bf16.msra.mxu0 %v2664
    %2707 = vmatprep.subr.bf16.mxu0 0
    %2708 = vmatpush1.bf16.msra.mxu0 %v2665
    %2709 = vmatprep.subr.bf16.mxu0 0
    %2710 = vmatpush1.bf16.msra.mxu0 %v2666
    %2711 = vmatprep.subr.bf16.mxu0 0
    %2712 = vmatpush1.bf16.msra.mxu0 %v2667
    %2713 = vmatprep.subr.bf16.mxu0 0
    %2714 = vmatpush1.bf16.msra.mxu0 %v2668
    %2715 = vmatprep.subr.bf16.mxu0 0
    %2716 = vmatpush1.bf16.msra.mxu0 %v2669
    %2717 = vmatprep.subr.bf16.mxu0 0
    %2718 = vmatpush1.bf16.msra.mxu0 %v2670
    %2719 = vmatprep.mubr.bf16.mxu0 %v2551
    %2720 = vmatmul.mubr.bf16.gmra.mrb[0].mxu0 %v2550
    %v2721 = vpop.f32.mrb[0].mxu0
    %v2722 = vadd.f32 %v2589, %v2721
    %v2723 = vpop.f32.mrb[0].mxu0
    %v2724 = vpop.f32.mrb[0].mxu0
    %v2725 = vadd.f32 %v2589, %v2724
    %v2726 = vpop.f32.mrb[0].mxu0
    %2727 = vdwg.mxu0
    %v2728 = vmax.f32 %v2722, 0.0
    %v2729 = vmax.f32 %v2725, 0.0
    %v2730 = vpack.c.bf16 %v2729, %v2728
    %v2731 = vld [vmem:[#allocation10] sm:$0xf]
    %v2732 = vld [vmem:[#allocation10 + $0x4] sm:$0xf]
    %v2733 = vld [vmem:[#allocation10 + $0x8] sm:$0xf]
    %v2734 = vld [vmem:[#allocation10 + $0xc] sm:$0xf]
    %v2735 = vld [vmem:[#allocation10 + $0x10] sm:$0xf]
    %v2736 = vld [vmem:[#allocation10 + $0x14] sm:$0xf]
    %v2737 = vld [vmem:[#allocation10 + $0x18] sm:$0xf]
    %v2738 = vld [vmem:[#allocation10 + $0x1c] sm:$0xf]
    %v2739 = vld [vmem:[#allocation10 + $0x20] sm:$0xf]
    %v2740 = vld [vmem:[#allocation10 + $0x24] sm:$0xf]
    %v2741 = vld [vmem:[#allocation10 + $0x28] sm:$0xf]
    %v2742 = vld [vmem:[#allocation10 + $0x2c] sm:$0xf]
    %v2743 = vld [vmem:[#allocation10 + $0x30] sm:$0xf]
    %v2744 = vld [vmem:[#allocation10 + $0x34] sm:$0xf]
    %v2745 = vld [vmem:[#allocation10 + $0x38] sm:$0xf]
    %v2746 = vld [vmem:[#allocation10 + $0x3c] sm:$0xf]
    %v2747 = vld [vmem:[%s8] sm:$0x1]
    %v2749 = vlaneseq
    %v2750 = vshrl.u32 %v2749, 7
    %v2751 = vsub.s32 0, %v2750
    %v2752 = vrot.slane %v2747, %v2751
    %v2770 = vunpack.c.l.b16 %v2731
    %v2771 = vunpack.c.l.b16 %v2732
    %v2772 = vunpack.c.l.b16 %v2733
    %v2773 = vunpack.c.l.b16 %v2734
    %v2774 = vunpack.c.l.b16 %v2735
    %v2775 = vunpack.c.l.b16 %v2736
    %v2776 = vunpack.c.l.b16 %v2737
    %v2777 = vunpack.c.l.b16 %v2738
    %v2778 = vunpack.c.l.b16 %v2739
    %v2779 = vunpack.c.l.b16 %v2740
    %v2780 = vunpack.c.l.b16 %v2741
    %v2781 = vunpack.c.l.b16 %v2742
    %v2782 = vunpack.c.l.b16 %v2743
    %v2783 = vunpack.c.l.b16 %v2744
    %v2784 = vunpack.c.l.b16 %v2745
    %v2785 = vunpack.c.l.b16 %v2746
    %v2786 = vpack.c.b16 %v2771, %v2770
    %v2787 = vpack.c.b16 %v2773, %v2772
    %v2788 = vpack.c.b16 %v2775, %v2774
    %v2789 = vpack.c.b16 %v2777, %v2776
    %v2790 = vpack.c.b16 %v2779, %v2778
    %v2791 = vpack.c.b16 %v2781, %v2780
    %v2792 = vpack.c.b16 %v2783, %v2782
    %v2793 = vpack.c.b16 %v2785, %v2784
    %2802 = vmatprep.subr.bf16.mxu0 0
    %2803 = vmatpush1.bf16.msra.mxu0 %v2786
    %2804 = vmatprep.subr.bf16.mxu0 0
    %2805 = vmatpush1.bf16.msra.mxu0 %v2787
    %2806 = vmatprep.subr.bf16.mxu0 0
    %2807 = vmatpush1.bf16.msra.mxu0 %v2788
    %2808 = vmatprep.subr.bf16.mxu0 0
    %2809 = vmatpush1.bf16.msra.mxu0 %v2789
    %2810 = vmatprep.subr.bf16.mxu0 0
    %2811 = vmatpush1.bf16.msra.mxu0 %v2790
    %2812 = vmatprep.subr.bf16.mxu0 0
    %2813 = vmatpush1.bf16.msra.mxu0 %v2791
    %2814 = vmatprep.subr.bf16.mxu0 0
    %2815 = vmatpush1.bf16.msra.mxu0 %v2792
    %2816 = vmatprep.subr.bf16.mxu0 0
    %2817 = vmatpush1.bf16.msra.mxu0 %v2793
    %2818 = vmatprep.subr.bf16.mxu0 0
    %2819 = vmatpush1.bf16.msra.mxu0 0
    %2820 = vmatprep.subr.bf16.mxu0 0
    %2821 = vmatpush1.bf16.msra.mxu0 0
    %2822 = vmatprep.subr.bf16.mxu0 0
    %2823 = vmatpush1.bf16.msra.mxu0 0
    %2824 = vmatprep.subr.bf16.mxu0 0
    %2825 = vmatpush1.bf16.msra.mxu0 0
    %2826 = vmatprep.subr.bf16.mxu0 0
    %2827 = vmatpush1.bf16.msra.mxu0 0
    %2828 = vmatprep.subr.bf16.mxu0 0
    %2829 = vmatpush1.bf16.msra.mxu0 0
    %2830 = vmatprep.subr.bf16.mxu0 0
    %2831 = vmatpush1.bf16.msra.mxu0 0
    %2832 = vmatprep.subr.bf16.mxu0 0
    %2833 = vmatpush1.bf16.msra.mxu0 0
    %2834 = vmatprep.mubr.bf16.mxu0 0
    %2835 = vmatmul.mubr.bf16.gmra.mrb[0].mxu0 %v2730
    %v2836 = vpop.f32.mrb[0].mxu0
    %v2837 = vadd.f32 %v2752, %v2836
    %v2838 = vpop.f32.mrb[0].mxu0
    %v2839 = vpop.f32.mrb[0].mxu0
    %v2840 = vadd.f32 %v2752, %v2839
    %v2841 = vpop.f32.mrb[0].mxu0
    %2842 = vdwg.mxu0
    %2843 = vst [vmem:[#allocation11] sm:$0xff] %v2837
    %2844 = vst [vmem:[#allocation11 + $0x8] sm:$0xff] %v2840
    // Predicated region
    $region58: #{tpu_custom_call.1} parent=1 // pred_check
      _
    $region59: #{tpu_custom_call.1} parent=1 // pred_check_branch
      %2846 = sbr.rel (0) target = $region61
    $region60: #{tpu_custom_call.1} parent=1 // pred_region
      %s2848 = ssub.s32 256, 256
      %2849 = vsyncadd [#allocation4], %s2848
      %s2850 = sshll.u32 [#allocation11], 4
      %s2851 = int_to_ptr.vmem [resolvable:$true] %s2850
      %2856 = dma.vmem_to_hbm [thread:$0]  %s2851, 256, %s9, [#allocation4], 128, 128, 8
    $region61: #{tpu_custom_call.1} parent=1 // pred_fallthru
      _
    // Predicated region
    $region62: #{tpu_custom_call.1} parent=1 // pred_check
      _
    $region63: #{tpu_custom_call.1} parent=1 // pred_check_branch
      %2858 = sbr.rel (0) target = $region65
    $region64: #{tpu_custom_call.1} parent=1 // pred_region
      %2859 = dma.done [#allocation4], 256
    $region65: #{tpu_custom_call.1} parent=1 // pred_fallthru
      _
    %2860 = vsyncpa [#allocation3], 1
    %2861 = vsyncpa [#allocation6], 1
    %2862 = vsyncpa [#allocation9], 1
    %2863 = vsyncpa [#allocation4], 1

</llo_original>
